<compile_context>
chip_gen: v5e
topology: v5e:2x2
jax: 0.10.0
libtpu: 0.0.40
codegen_flags: <defaults>
</compile_context>

<pallas_src>
from functools import partial

import jax
import jax.numpy as jnp
from jax import lax
from jax.experimental import pallas as pl
from jax.experimental.pallas import tpu as pltpu


# ----------------------------------------------------------------------------
# In-kernel 3x3 conv helper (channels on sublanes, flattened spatial on lanes)
# ----------------------------------------------------------------------------
def _conv3x3_lanes(a, w9t, masks, h, w):
    """a: (Cin, H*W) activation.  w9t: (Cout, 9*Cin).  masks: (2, H*W).
    Returns (Cout, H*W) = 3x3, pad=1, stride=1 conv."""
    cin, hw = a.shape
    zpad = jnp.zeros((cin, w + 1), dtype=a.dtype)
    a_ext = jnp.concatenate([zpad, a, zpad], axis=1)      # (Cin, H*W + 2W + 2)
    not_left = masks[0:1, :]                              # zero where out-col == 0
    not_right = masks[1:2, :]                             # zero where out-col == W-1
    patches = []
    for kh in range(3):
        for kw in range(3):
            start = kh * w + kw                           # static lane-window slice
            p = a_ext[:, start:start + hw]                # (Cin, H*W)
            if kw == 0:
                p = p * not_left
            elif kw == 2:
                p = p * not_right
            patches.append(p)
    im2col = jnp.concatenate(patches, axis=0)             # (9*Cin, H*W)
    return jnp.dot(w9t, im2col, preferred_element_type=jnp.float32)


# ----------------------------------------------------------------------------
# Kernel 1: BN1-affine + ReLU + conv1(3x3, stride s) [+ fused 1x1 shortcut]
#           + per-batch BN2 partial statistics (sum, sumsq of conv1 output)
# ----------------------------------------------------------------------------
def _make_block1_kernel(h, w, stride, has_sc):
    def kernel(*refs):
        i = 0
        x_ref = refs[i]; i += 1          # (1, Cin, H*W)
        scale_ref = refs[i]; i += 1      # (Cin, 1)
        shift_ref = refs[i]; i += 1      # (Cin, 1)
        mask_ref = refs[i]; i += 1       # (2, H*W)
        w1_ref = refs[i]; i += 1         # (Cout, 9*Cin)
        wsc_ref = None
        sel_ref = None
        if has_sc:
            wsc_ref = refs[i]; i += 1    # (Cout, Cin)
        if stride != 1:
            sel_ref = refs[i]; i += 1    # (H*W, Ho*Wo) 0/1 subsample selector
        o1_ref = refs[i]; i += 1         # (1, Cout, Ho*Wo)
        sc_out_ref = None
        if has_sc:
            sc_out_ref = refs[i]; i += 1  # (1, Cout, Ho*Wo)
        stats_ref = refs[i]; i += 1       # (1, Cout, 2)  [sum, sumsq] of o1

        # fused BN-apply + ReLU (VPU work, hidden under the MXU)
        a = jnp.maximum(x_ref[0] * scale_ref[...] + shift_ref[...], 0.0)

        conv = _conv3x3_lanes(a, w1_ref[...], mask_ref[...], h, w)   # (Cout, H*W)
        if stride != 1:
            sel = sel_ref[...]
            conv = jnp.dot(conv, sel, preferred_element_type=jnp.float32)
        o1_ref[0] = conv.astype(o1_ref.dtype)

        # per-batch partial BN2 statistics (XLU cross-lane reduce, tiny output)
        s = jnp.sum(conv, axis=1, keepdims=True)                      # (Cout, 1)
        ss = jnp.sum(conv * conv, axis=1, keepdims=True)              # (Cout, 1)
        stats_ref[0] = jnp.concatenate([s, ss], axis=1).astype(stats_ref.dtype)

        if has_sc:
            a_s = a if stride == 1 else jnp.dot(a, sel,
                                                preferred_element_type=jnp.float32)
            sc = jnp.dot(wsc_ref[...], a_s, preferred_element_type=jnp.float32)
            sc_out_ref[0] = sc.astype(sc_out_ref.dtype)
    return kernel


# ----------------------------------------------------------------------------
# Kernel 2: BN2-affine + ReLU + conv2(3x3, stride 1) + residual add
# ----------------------------------------------------------------------------
def _make_block2_kernel(h, w):
    def kernel(x_ref, scale_ref, shift_ref, mask_ref, w2_ref, res_ref, o_ref):
        a = jnp.maximum(x_ref[0] * scale_ref[...] + shift_ref[...], 0.0)
        conv = _conv3x3_lanes(a, w2_ref[...], mask_ref[...], h, w)
        o_ref[0] = (conv + res_ref[0]).astype(o_ref.dtype)
    return kernel


# ----------------------------------------------------------------------------
# Wrapper
# ----------------------------------------------------------------------------
def _col_masks(h, w):
    col = jnp.arange(h * w, dtype=jnp.int32) % w
    not_left = (col != 0).astype(jnp.float32)
    not_right = (col != (w - 1)).astype(jnp.float32)
    return jnp.stack([not_left, not_right], axis=0)        # (2, H*W)


@partial(jax.jit, static_argnames=("stride",))
def preact_block_forward(x_nchw, params, *, stride, eps=1e-5):
    """Pallas implementation of PreActBlock.forward.  Input/output are NCHW."""
    n, cin, h, w = x_nchw.shape
    cout = params["w1"].shape[-1]
    hw = h * w
    ho = (h - 1) // stride + 1
    wo = (w - 1) // stride + 1
    hwo = ho * wo
    has_sc = (stride != 1) or (cin != cout)

    x = x_nchw.astype(jnp.float32).reshape(n, cin, hw)     # free reshape, stays NCHW

    # ---- BN1 statistics (training mode: batch mean, biased variance) -------
    # Single fused pass over x: sum & sum-of-squares.
    cnt1 = n * hw
    s1 = jnp.sum(x, axis=(0, 2))
    ss1 = jnp.sum(x * x, axis=(0, 2))
    mean1 = s1 / cnt1
    var1 = jnp.maximum(ss1 / cnt1 - mean1 * mean1, 0.0)
    inv1 = params["bn1_gamma"] * lax.rsqrt(var1 + eps)
    scale1 = inv1.reshape(cin, 1)
    shift1 = (params["bn1_beta"] - mean1 * inv1).reshape(cin, 1)

    w1t = jnp.transpose(params["w1"], (3, 0, 1, 2)).reshape(cout, 9 * cin)
    masks1 = _col_masks(h, w)

    inputs = [x, scale1, shift1, masks1, w1t]
    in_specs = [
        pl.BlockSpec((1, cin, hw), lambda i: (i, 0, 0)),
        pl.BlockSpec((cin, 1), lambda i: (0, 0)),
        pl.BlockSpec((cin, 1), lambda i: (0, 0)),
        pl.BlockSpec((2, hw), lambda i: (0, 0)),
        pl.BlockSpec((cout, 9 * cin), lambda i: (0, 0)),
    ]
    if has_sc:
        wsc_t = jnp.transpose(params["w_sc"], (1, 0))      # (Cout, Cin)
        inputs.append(wsc_t)
        in_specs.append(pl.BlockSpec((cout, cin), lambda i: (0, 0)))
    if stride != 1:
        p_idx = ((jnp.arange(ho) * stride)[:, None] * w
                 + (jnp.arange(wo) * stride)[None, :]).reshape(-1)
        sel = (jnp.arange(hw)[:, None] == p_idx[None, :]).astype(jnp.float32)
        inputs.append(sel)                                  # (H*W, Ho*Wo)
        in_specs.append(pl.BlockSpec((hw, hwo), lambda i: (0, 0)))

    out_shapes = [jax.ShapeDtypeStruct((n, cout, hwo), jnp.float32)]
    out_specs = [pl.BlockSpec((1, cout, hwo), lambda i: (i, 0, 0))]
    if has_sc:
        out_shapes.append(jax.ShapeDtypeStruct((n, cout, hwo), jnp.float32))
        out_specs.append(pl.BlockSpec((1, cout, hwo), lambda i: (i, 0, 0)))
    # per-batch BN2 partial stats (channel sum / sumsq of o1)
    out_shapes.append(jax.ShapeDtypeStruct((n, cout, 2), jnp.float32))
    out_specs.append(pl.BlockSpec((1, cout, 2), lambda i: (i, 0, 0)))

    cp = pltpu.CompilerParams(dimension_semantics=("parallel",),
                              vmem_limit_bytes=32 * 1024 * 1024)

    res = pl.pallas_call(
        _make_block1_kernel(h, w, stride, has_sc),
        out_shape=tuple(out_shapes), grid=(n,),
        in_specs=in_specs, out_specs=tuple(out_specs),
        compiler_params=cp)(*inputs)
    o1 = res[0]
    shortcut = res[1] if has_sc else x                      # identity: pre-BN input
    stats = res[-1]                                         # (n, Cout, 2)

    # ---- BN2 statistics from fused partial sums (no extra HBM read of o1) --
    tot = jnp.sum(stats, axis=0)                            # (Cout, 2)
    cnt2 = n * hwo
    mean2 = tot[:, 0] / cnt2
    var2 = jnp.maximum(tot[:, 1] / cnt2 - mean2 * mean2, 0.0)
    inv2 = params["bn2_gamma"] * lax.rsqrt(var2 + eps)
    scale2 = inv2.reshape(cout, 1)
    shift2 = (params["bn2_beta"] - mean2 * inv2).reshape(cout, 1)

    w2t = jnp.transpose(params["w2"], (3, 0, 1, 2)).reshape(cout, 9 * cout)
    masks2 = _col_masks(ho, wo)

    out = pl.pallas_call(
        _make_block2_kernel(ho, wo),
        out_shape=jax.ShapeDtypeStruct((n, cout, hwo), jnp.float32),
        grid=(n,),
        in_specs=[
            pl.BlockSpec((1, cout, hwo), lambda i: (i, 0, 0)),
            pl.BlockSpec((cout, 1), lambda i: (0, 0)),
            pl.BlockSpec((cout, 1), lambda i: (0, 0)),
            pl.BlockSpec((2, hwo), lambda i: (0, 0)),
            pl.BlockSpec((cout, 9 * cout), lambda i: (0, 0)),
            pl.BlockSpec((1, cout, hwo), lambda i: (i, 0, 0)),
        ],
        out_specs=pl.BlockSpec((1, cout, hwo), lambda i: (i, 0, 0)),
        compiler_params=cp)(o1, scale2, shift2, masks2, w2t, shortcut)

    return out.reshape(n, cout, ho, wo)                     # free reshape -> NCHW


# ----------------------------------------------------------------------------
# Pure-JAX reference (lax.conv) used only for self-checking
# ----------------------------------------------------------------------------
def _ref_forward(x_nchw, params, stride):
    def bn_relu(x, g, b, eps=1e-5):
        mean = x.mean(axis=(0, 2, 3), keepdims=True)
        var = ((x - mean) ** 2).mean(axis=(0, 2, 3), keepdims=True)
        xn = (x - mean) / jnp.sqrt(var + eps)
        return jnp.maximum(xn * g[None, :, None, None] + b[None, :, None, None], 0.0)

    def conv(x, w_oihw, s, p):
        return lax.conv_general_dilated(
            x, w_oihw, (s, s), ((p, p), (p, p)),
            dimension_numbers=("NCHW", "OIHW", "NCHW"))

    w1 = jnp.transpose(params["w1"], (3, 2, 0, 1))
    w2 = jnp.transpose(params["w2"], (3, 2, 0, 1))
    in_planes, planes = params["w1"].shape[2], params["w1"].shape[3]

    a1 = bn_relu(x_nchw, params["bn1_gamma"], params["bn1_beta"])
    if stride != 1 or in_planes != planes:
        w_sc = jnp.transpose(params["w_sc"], (1, 0))[:, :, None, None]
        shortcut = conv(a1, w_sc, stride, 0)
    else:
        shortcut = x_nchw
    o1 = conv(a1, w1, stride, 1)
    a2 = bn_relu(o1, params["bn2_gamma"], params["bn2_beta"])
    return conv(a2, w2, 1, 1) + shortcut


# ----------------------------------------------------------------------------
# Parameter construction (deterministic, PyTorch shapes; stored HWIO / IO)
# ----------------------------------------------------------------------------
def make_params(key, in_planes, planes, stride):
    ks = jax.random.split(key, 7)
    params = {
        "bn1_gamma": 1.0 + 0.1 * jax.random.normal(ks[0], (in_planes,), jnp.float32),
        "bn1_beta": 0.1 * jax.random.normal(ks[1], (in_planes,), jnp.float32),
        "w1": 0.1 * jax.random.normal(ks[2], (3, 3, in_planes, planes), jnp.float32),
        "bn2_gamma": 1.0 + 0.1 * jax.random.normal(ks[3], (planes,), jnp.float32),
        "bn2_beta": 0.1 * jax.random.normal(ks[4], (planes,), jnp.float32),
        "w2": 0.1 * jax.random.normal(ks[5], (3, 3, planes, planes), jnp.float32),
    }
    if stride != 1 or in_planes != planes:
        params["w_sc"] = 0.1 * jax.random.normal(ks[6], (in_planes, planes), jnp.float32)
    return params


if __name__ == "__main__":
    key = jax.random.PRNGKey(0)
    k_x1, k_x2, k_p1, k_p2 = jax.random.split(key, 4)

    # Config 1: identity shortcut (stride=1, in_planes == planes)
    x1 = jax.random.normal(k_x1, (2, 4, 16, 16), jnp.float32)   # NCHW
    p1 = make_params(k_p1, in_planes=4, planes=4, stride=1)
    out1 = jax.block_until_ready(preact_block_forward(x1, p1, stride=1))
    ref1 = _ref_forward(x1, p1, stride=1)
    assert out1.shape == (2, 4, 16, 16)
    assert jnp.allclose(out1, ref1, rtol=1e-2, atol=1e-2), "config1 mismatch"

    # Config 2: conv shortcut (stride=2, planes != in_planes)
    x2 = jax.random.normal(k_x2, (2, 4, 8, 8), jnp.float32)     # NCHW
    p2 = make_params(k_p2, in_planes=4, planes=8, stride=2)
    out2 = jax.block_until_ready(preact_block_forward(x2, p2, stride=2))
    ref2 = _ref_forward(x2, p2, stride=2)
    assert out2.shape == (2, 8, 4, 4)
    assert jnp.allclose(out2, ref2, rtol=1e-2, atol=1e-2), "config2 mismatch"

    print("KERNEL_OK")
</pallas_src>

<mosaic_0001>
module attributes {stable_mosaic.version = 11 : i64} {
  func.func @kernel(%arg0: i32, %arg1: memref<1x4x256xf32, #tpu.memory_space<vmem>>, %arg2: memref<4x1xf32, #tpu.memory_space<vmem>>, %arg3: memref<4x1xf32, #tpu.memory_space<vmem>>, %arg4: memref<2x256xf32, #tpu.memory_space<vmem>>, %arg5: memref<4x36xf32, #tpu.memory_space<vmem>>, %arg6: memref<1x4x256xf32, #tpu.memory_space<vmem>>, %arg7: memref<1x4x256xf32, #tpu.memory_space<vmem>>) attributes {dimension_semantics = [#tpu.dimension_semantics<parallel>], iteration_bounds = array<i64: 2>, scalar_prefetch = 0 : i64, scratch_operands = 0 : i64, tpu.core_type = #tpu.core_type<tc>, window_params = [{transform_indices = @transform_0, window_bounds = array<i64: 1, 4, 256>}, {pipeline_mode = #tpu.pipeline_mode<synchronous>, transform_indices = @transform_1, window_bounds = array<i64: 4, 1>}, {pipeline_mode = #tpu.pipeline_mode<synchronous>, transform_indices = @transform_2, window_bounds = array<i64: 4, 1>}, {pipeline_mode = #tpu.pipeline_mode<synchronous>, transform_indices = @transform_3, window_bounds = array<i64: 2, 256>}, {pipeline_mode = #tpu.pipeline_mode<synchronous>, transform_indices = @transform_4, window_bounds = array<i64: 4, 36>}, {transform_indices = @transform_5, window_bounds = array<i64: 1, 4, 256>}, {transform_indices = @transform_6, window_bounds = array<i64: 1, 4, 256>}]} {
    %c0 = arith.constant 0 : index
    %c0_0 = arith.constant 0 : index
    %c0_1 = arith.constant 0 : index
    %0 = vector.load %arg1[%c0, %c0_0, %c0_1] : memref<1x4x256xf32, #tpu.memory_space<vmem>>, vector<1x4x256xf32>
    %1 = vector.shape_cast %0 : vector<1x4x256xf32> to vector<4x256xf32>
    %c0_2 = arith.constant 0 : index
    %c0_3 = arith.constant 0 : index
    %2 = vector.load %arg2[%c0_2, %c0_3] : memref<4x1xf32, #tpu.memory_space<vmem>>, vector<4x1xf32>
    %3 = vector.broadcast %2 : vector<4x1xf32> to vector<4x256xf32>
    %4 = arith.mulf %1, %3 : vector<4x256xf32>
    %c0_4 = arith.constant 0 : index
    %c0_5 = arith.constant 0 : index
    %5 = vector.load %arg3[%c0_4, %c0_5] : memref<4x1xf32, #tpu.memory_space<vmem>>, vector<4x1xf32>
    %6 = vector.broadcast %5 : vector<4x1xf32> to vector<4x256xf32>
    %7 = arith.addf %4, %6 : vector<4x256xf32>
    %cst = arith.constant 0.000000e+00 : f32
    %8 = vector.broadcast %cst : f32 to vector<4x256xf32>
    %9 = arith.maximumf %7, %8 : vector<4x256xf32>
    %c0_6 = arith.constant 0 : index
    %c0_7 = arith.constant 0 : index
    %10 = vector.load %arg5[%c0_6, %c0_7] : memref<4x36xf32, #tpu.memory_space<vmem>>, vector<4x36xf32>
    %c0_8 = arith.constant 0 : index
    %c0_9 = arith.constant 0 : index
    %11 = vector.load %arg4[%c0_8, %c0_9] : memref<2x256xf32, #tpu.memory_space<vmem>>, vector<2x256xf32>
    %cst_10 = arith.constant 0.000000e+00 : f32
    %12 = vector.broadcast %cst_10 : f32 to vector<4x17xf32>
    %13 = tpu.concatenate %12, %9, %12 in 1 : vector<4x17xf32>, vector<4x256xf32>, vector<4x17xf32> -> vector<4x290xf32>
    %14 = vector.extract_strided_slice %11 {offsets = [0, 0], sizes = [1, 256], strides = [1, 1]} : vector<2x256xf32> to vector<1x256xf32>
    %15 = vector.extract_strided_slice %11 {offsets = [1, 0], sizes = [1, 256], strides = [1, 1]} : vector<2x256xf32> to vector<1x256xf32>
    %16 = vector.extract_strided_slice %13 {offsets = [0, 0], sizes = [4, 256], strides = [1, 1]} : vector<4x290xf32> to vector<4x256xf32>
    %17 = vector.broadcast %14 : vector<1x256xf32> to vector<4x256xf32>
    %18 = arith.mulf %16, %17 : vector<4x256xf32>
    %19 = vector.extract_strided_slice %13 {offsets = [0, 1], sizes = [4, 256], strides = [1, 1]} : vector<4x290xf32> to vector<4x256xf32>
    %20 = vector.extract_strided_slice %13 {offsets = [0, 2], sizes = [4, 256], strides = [1, 1]} : vector<4x290xf32> to vector<4x256xf32>
    %21 = vector.broadcast %15 : vector<1x256xf32> to vector<4x256xf32>
    %22 = arith.mulf %20, %21 : vector<4x256xf32>
    %23 = vector.extract_strided_slice %13 {offsets = [0, 16], sizes = [4, 256], strides = [1, 1]} : vector<4x290xf32> to vector<4x256xf32>
    %24 = vector.broadcast %14 : vector<1x256xf32> to vector<4x256xf32>
    %25 = arith.mulf %23, %24 : vector<4x256xf32>
    %26 = vector.extract_strided_slice %13 {offsets = [0, 17], sizes = [4, 256], strides = [1, 1]} : vector<4x290xf32> to vector<4x256xf32>
    %27 = vector.extract_strided_slice %13 {offsets = [0, 18], sizes = [4, 256], strides = [1, 1]} : vector<4x290xf32> to vector<4x256xf32>
    %28 = vector.broadcast %15 : vector<1x256xf32> to vector<4x256xf32>
    %29 = arith.mulf %27, %28 : vector<4x256xf32>
    %30 = vector.extract_strided_slice %13 {offsets = [0, 32], sizes = [4, 256], strides = [1, 1]} : vector<4x290xf32> to vector<4x256xf32>
    %31 = vector.broadcast %14 : vector<1x256xf32> to vector<4x256xf32>
    %32 = arith.mulf %30, %31 : vector<4x256xf32>
    %33 = vector.extract_strided_slice %13 {offsets = [0, 33], sizes = [4, 256], strides = [1, 1]} : vector<4x290xf32> to vector<4x256xf32>
    %34 = vector.extract_strided_slice %13 {offsets = [0, 34], sizes = [4, 256], strides = [1, 1]} : vector<4x290xf32> to vector<4x256xf32>
    %35 = vector.broadcast %15 : vector<1x256xf32> to vector<4x256xf32>
    %36 = arith.mulf %34, %35 : vector<4x256xf32>
    %37 = tpu.concatenate %18, %19, %22, %25, %26, %29, %32, %33, %36 in 0 : vector<4x256xf32>, vector<4x256xf32>, vector<4x256xf32>, vector<4x256xf32>, vector<4x256xf32>, vector<4x256xf32>, vector<4x256xf32>, vector<4x256xf32>, vector<4x256xf32> -> vector<36x256xf32>
    %cst_11 = arith.constant dense<0.000000e+00> : vector<4x256xf32>
    %38 = tpu.matmul %10, %37, %cst_11 {dimension_numbers = #tpu.dot_dimension_numbers<[1], [0], [0], [1], [0, 0, 1, 1], [], []>} : vector<4x36xf32>, vector<36x256xf32>, vector<4x256xf32> -> vector<4x256xf32>
    %c0_12 = arith.constant 0 : index
    %c0_13 = arith.constant 0 : index
    %c0_14 = arith.constant 0 : index
    %39 = vector.load %arg6[%c0_12, %c0_13, %c0_14] : memref<1x4x256xf32, #tpu.memory_space<vmem>>, vector<1x4x256xf32>
    %40 = vector.shape_cast %39 : vector<1x4x256xf32> to vector<4x256xf32>
    %41 = arith.addf %38, %40 : vector<4x256xf32>
    %c0_15 = arith.constant 0 : index
    %c0_16 = arith.constant 0 : index
    %c0_17 = arith.constant 0 : index
    %42 = vector.load %arg7[%c0_15, %c0_16, %c0_17] : memref<1x4x256xf32, #tpu.memory_space<vmem>>, vector<1x4x256xf32>
    %43 = vector.shape_cast %42 : vector<1x4x256xf32> to vector<4x256xf32>
    %44 = vector.shape_cast %41 : vector<4x256xf32> to vector<1x4x256xf32>
    tpu.vector_store %arg7[%c0_15, %c0_16, %c0_17], %44 {strides = array<i32>} : memref<1x4x256xf32, #tpu.memory_space<vmem>>, vector<1x4x256xf32>,
    return
  }
  func.func @transform_0(%arg0: i32) -> (i32, i32, i32) {
    %c0_i32 = arith.constant 0 : i32
    %c0_i32_0 = arith.constant 0 : i32
    %c0_i32_1 = arith.constant 0 : i32
    return %arg0, %c0_i32, %c0_i32_0 : i32, i32, i32
  }
  func.func @transform_1(%arg0: i32) -> (i32, i32) {
    %c0_i32 = arith.constant 0 : i32
    %c0_i32_0 = arith.constant 0 : i32
    %c0_i32_1 = arith.constant 0 : i32
    return %c0_i32, %c0_i32_0 : i32, i32
  }
  func.func @transform_2(%arg0: i32) -> (i32, i32) {
    %c0_i32 = arith.constant 0 : i32
    %c0_i32_0 = arith.constant 0 : i32
    %c0_i32_1 = arith.constant 0 : i32
    return %c0_i32, %c0_i32_0 : i32, i32
  }
  func.func @transform_3(%arg0: i32) -> (i32, i32) {
    %c0_i32 = arith.constant 0 : i32
    %c0_i32_0 = arith.constant 0 : i32
    %c0_i32_1 = arith.constant 0 : i32
    return %c0_i32, %c0_i32_0 : i32, i32
  }
  func.func @transform_4(%arg0: i32) -> (i32, i32) {
    %c0_i32 = arith.constant 0 : i32
    %c0_i32_0 = arith.constant 0 : i32
    %c0_i32_1 = arith.constant 0 : i32
    return %c0_i32, %c0_i32_0 : i32, i32
  }
  func.func @transform_5(%arg0: i32) -> (i32, i32, i32) {
    %c0_i32 = arith.constant 0 : i32
    %c0_i32_0 = arith.constant 0 : i32
    %c0_i32_1 = arith.constant 0 : i32
    return %arg0, %c0_i32, %c0_i32_0 : i32, i32, i32
  }
  func.func @transform_6(%arg0: i32) -> (i32, i32, i32) {
    %c0_i32 = arith.constant 0 : i32
    %c0_i32_0 = arith.constant 0 : i32
    %c0_i32_1 = arith.constant 0 : i32
    return %arg0, %c0_i32, %c0_i32_0 : i32, i32, i32
  }
}

module attributes {stable_mosaic.version = 11 : i64} {
  func.func @kernel(%arg0: i32, %arg1: memref<1x4x256xf32, #tpu.memory_space<vmem>>, %arg2: memref<4x1xf32, #tpu.memory_space<vmem>>, %arg3: memref<4x1xf32, #tpu.memory_space<vmem>>, %arg4: memref<2x256xf32, #tpu.memory_space<vmem>>, %arg5: memref<4x36xf32, #tpu.memory_space<vmem>>, %arg6: memref<1x4x256xf32, #tpu.memory_space<vmem>>, %arg7: memref<1x4x2xf32, #tpu.memory_space<vmem>>) attributes {dimension_semantics = [#tpu.dimension_semantics<parallel>], iteration_bounds = array<i64: 2>, scalar_prefetch = 0 : i64, scratch_operands = 0 : i64, tpu.core_type = #tpu.core_type<tc>, window_params = [{transform_indices = @transform_0, window_bounds = array<i64: 1, 4, 256>}, {pipeline_mode = #tpu.pipeline_mode<synchronous>, transform_indices = @transform_1, window_bounds = array<i64: 4, 1>}, {pipeline_mode = #tpu.pipeline_mode<synchronous>, transform_indices = @transform_2, window_bounds = array<i64: 4, 1>}, {pipeline_mode = #tpu.pipeline_mode<synchronous>, transform_indices = @transform_3, window_bounds = array<i64: 2, 256>}, {pipeline_mode = #tpu.pipeline_mode<synchronous>, transform_indices = @transform_4, window_bounds = array<i64: 4, 36>}, {transform_indices = @transform_5, window_bounds = array<i64: 1, 4, 256>}, {transform_indices = @transform_6, window_bounds = array<i64: 1, 4, 2>}]} {
    %c0 = arith.constant 0 : index
    %c0_0 = arith.constant 0 : index
    %c0_1 = arith.constant 0 : index
    %0 = vector.load %arg1[%c0, %c0_0, %c0_1] : memref<1x4x256xf32, #tpu.memory_space<vmem>>, vector<1x4x256xf32>
    %1 = vector.shape_cast %0 : vector<1x4x256xf32> to vector<4x256xf32>
    %c0_2 = arith.constant 0 : index
    %c0_3 = arith.constant 0 : index
    %2 = vector.load %arg2[%c0_2, %c0_3] : memref<4x1xf32, #tpu.memory_space<vmem>>, vector<4x1xf32>
    %3 = vector.broadcast %2 : vector<4x1xf32> to vector<4x256xf32>
    %4 = arith.mulf %1, %3 : vector<4x256xf32>
    %c0_4 = arith.constant 0 : index
    %c0_5 = arith.constant 0 : index
    %5 = vector.load %arg3[%c0_4, %c0_5] : memref<4x1xf32, #tpu.memory_space<vmem>>, vector<4x1xf32>
    %6 = vector.broadcast %5 : vector<4x1xf32> to vector<4x256xf32>
    %7 = arith.addf %4, %6 : vector<4x256xf32>
    %cst = arith.constant 0.000000e+00 : f32
    %8 = vector.broadcast %cst : f32 to vector<4x256xf32>
    %9 = arith.maximumf %7, %8 : vector<4x256xf32>
    %c0_6 = arith.constant 0 : index
    %c0_7 = arith.constant 0 : index
    %10 = vector.load %arg5[%c0_6, %c0_7] : memref<4x36xf32, #tpu.memory_space<vmem>>, vector<4x36xf32>
    %c0_8 = arith.constant 0 : index
    %c0_9 = arith.constant 0 : index
    %11 = vector.load %arg4[%c0_8, %c0_9] : memref<2x256xf32, #tpu.memory_space<vmem>>, vector<2x256xf32>
    %cst_10 = arith.constant 0.000000e+00 : f32
    %12 = vector.broadcast %cst_10 : f32 to vector<4x17xf32>
    %13 = tpu.concatenate %12, %9, %12 in 1 : vector<4x17xf32>, vector<4x256xf32>, vector<4x17xf32> -> vector<4x290xf32>
    %14 = vector.extract_strided_slice %11 {offsets = [0, 0], sizes = [1, 256], strides = [1, 1]} : vector<2x256xf32> to vector<1x256xf32>
    %15 = vector.extract_strided_slice %11 {offsets = [1, 0], sizes = [1, 256], strides = [1, 1]} : vector<2x256xf32> to vector<1x256xf32>
    %16 = vector.extract_strided_slice %13 {offsets = [0, 0], sizes = [4, 256], strides = [1, 1]} : vector<4x290xf32> to vector<4x256xf32>
    %17 = vector.broadcast %14 : vector<1x256xf32> to vector<4x256xf32>
    %18 = arith.mulf %16, %17 : vector<4x256xf32>
    %19 = vector.extract_strided_slice %13 {offsets = [0, 1], sizes = [4, 256], strides = [1, 1]} : vector<4x290xf32> to vector<4x256xf32>
    %20 = vector.extract_strided_slice %13 {offsets = [0, 2], sizes = [4, 256], strides = [1, 1]} : vector<4x290xf32> to vector<4x256xf32>
    %21 = vector.broadcast %15 : vector<1x256xf32> to vector<4x256xf32>
    %22 = arith.mulf %20, %21 : vector<4x256xf32>
    %23 = vector.extract_strided_slice %13 {offsets = [0, 16], sizes = [4, 256], strides = [1, 1]} : vector<4x290xf32> to vector<4x256xf32>
    %24 = vector.broadcast %14 : vector<1x256xf32> to vector<4x256xf32>
    %25 = arith.mulf %23, %24 : vector<4x256xf32>
    %26 = vector.extract_strided_slice %13 {offsets = [0, 17], sizes = [4, 256], strides = [1, 1]} : vector<4x290xf32> to vector<4x256xf32>
    %27 = vector.extract_strided_slice %13 {offsets = [0, 18], sizes = [4, 256], strides = [1, 1]} : vector<4x290xf32> to vector<4x256xf32>
    %28 = vector.broadcast %15 : vector<1x256xf32> to vector<4x256xf32>
    %29 = arith.mulf %27, %28 : vector<4x256xf32>
    %30 = vector.extract_strided_slice %13 {offsets = [0, 32], sizes = [4, 256], strides = [1, 1]} : vector<4x290xf32> to vector<4x256xf32>
    %31 = vector.broadcast %14 : vector<1x256xf32> to vector<4x256xf32>
    %32 = arith.mulf %30, %31 : vector<4x256xf32>
    %33 = vector.extract_strided_slice %13 {offsets = [0, 33], sizes = [4, 256], strides = [1, 1]} : vector<4x290xf32> to vector<4x256xf32>
    %34 = vector.extract_strided_slice %13 {offsets = [0, 34], sizes = [4, 256], strides = [1, 1]} : vector<4x290xf32> to vector<4x256xf32>
    %35 = vector.broadcast %15 : vector<1x256xf32> to vector<4x256xf32>
    %36 = arith.mulf %34, %35 : vector<4x256xf32>
    %37 = tpu.concatenate %18, %19, %22, %25, %26, %29, %32, %33, %36 in 0 : vector<4x256xf32>, vector<4x256xf32>, vector<4x256xf32>, vector<4x256xf32>, vector<4x256xf32>, vector<4x256xf32>, vector<4x256xf32>, vector<4x256xf32>, vector<4x256xf32> -> vector<36x256xf32>
    %cst_11 = arith.constant dense<0.000000e+00> : vector<4x256xf32>
    %38 = tpu.matmul %10, %37, %cst_11 {dimension_numbers = #tpu.dot_dimension_numbers<[1], [0], [0], [1], [0, 0, 1, 1], [], []>} : vector<4x36xf32>, vector<36x256xf32>, vector<4x256xf32> -> vector<4x256xf32>
    %c0_12 = arith.constant 0 : index
    %c0_13 = arith.constant 0 : index
    %c0_14 = arith.constant 0 : index
    %39 = vector.load %arg6[%c0_12, %c0_13, %c0_14] : memref<1x4x256xf32, #tpu.memory_space<vmem>>, vector<1x4x256xf32>
    %40 = vector.shape_cast %39 : vector<1x4x256xf32> to vector<4x256xf32>
    %41 = vector.shape_cast %38 : vector<4x256xf32> to vector<1x4x256xf32>
    tpu.vector_store %arg6[%c0_12, %c0_13, %c0_14], %41 {strides = array<i32>} : memref<1x4x256xf32, #tpu.memory_space<vmem>>, vector<1x4x256xf32>,
    %cst_15 = arith.constant dense<0.000000e+00> : vector<4xf32>
    %42 = vector.multi_reduction <add>, %38, %cst_15 [1] : vector<4x256xf32> to vector<4xf32>
    %43 = vector.shape_cast %42 : vector<4xf32> to vector<4x1xf32>
    %44 = arith.mulf %38, %38 : vector<4x256xf32>
    %cst_16 = arith.constant dense<0.000000e+00> : vector<4xf32>
    %45 = vector.multi_reduction <add>, %44, %cst_16 [1] : vector<4x256xf32> to vector<4xf32>
    %46 = vector.shape_cast %45 : vector<4xf32> to vector<4x1xf32>
    %47 = tpu.concatenate %43, %46 in 1 : vector<4x1xf32>, vector<4x1xf32> -> vector<4x2xf32>
    %c0_17 = arith.constant 0 : index
    %c0_18 = arith.constant 0 : index
    %c0_19 = arith.constant 0 : index
    %48 = vector.load %arg7[%c0_17, %c0_18, %c0_19] : memref<1x4x2xf32, #tpu.memory_space<vmem>>, vector<1x4x2xf32>
    %49 = vector.shape_cast %48 : vector<1x4x2xf32> to vector<4x2xf32>
    %50 = vector.shape_cast %47 : vector<4x2xf32> to vector<1x4x2xf32>
    tpu.vector_store %arg7[%c0_17, %c0_18, %c0_19], %50 {strides = array<i32>} : memref<1x4x2xf32, #tpu.memory_space<vmem>>, vector<1x4x2xf32>,
    return
  }
  func.func @transform_0(%arg0: i32) -> (i32, i32, i32) {
    %c0_i32 = arith.constant 0 : i32
    %c0_i32_0 = arith.constant 0 : i32
    %c0_i32_1 = arith.constant 0 : i32
    return %arg0, %c0_i32, %c0_i32_0 : i32, i32, i32
  }
  func.func @transform_1(%arg0: i32) -> (i32, i32) {
    %c0_i32 = arith.constant 0 : i32
    %c0_i32_0 = arith.constant 0 : i32
    %c0_i32_1 = arith.constant 0 : i32
    return %c0_i32, %c0_i32_0 : i32, i32
  }
  func.func @transform_2(%arg0: i32) -> (i32, i32) {
    %c0_i32 = arith.constant 0 : i32
    %c0_i32_0 = arith.constant 0 : i32
    %c0_i32_1 = arith.constant 0 : i32
    return %c0_i32, %c0_i32_0 : i32, i32
  }
  func.func @transform_3(%arg0: i32) -> (i32, i32) {
    %c0_i32 = arith.constant 0 : i32
    %c0_i32_0 = arith.constant 0 : i32
    %c0_i32_1 = arith.constant 0 : i32
    return %c0_i32, %c0_i32_0 : i32, i32
  }
  func.func @transform_4(%arg0: i32) -> (i32, i32) {
    %c0_i32 = arith.constant 0 : i32
    %c0_i32_0 = arith.constant 0 : i32
    %c0_i32_1 = arith.constant 0 : i32
    return %c0_i32, %c0_i32_0 : i32, i32
  }
  func.func @transform_5(%arg0: i32) -> (i32, i32, i32) {
    %c0_i32 = arith.constant 0 : i32
    %c0_i32_0 = arith.constant 0 : i32
    %c0_i32_1 = arith.constant 0 : i32
    return %arg0, %c0_i32, %c0_i32_0 : i32, i32, i32
  }
  func.func @transform_6(%arg0: i32) -> (i32, i32, i32) {
    %c0_i32 = arith.constant 0 : i32
    %c0_i32_0 = arith.constant 0 : i32
    %c0_i32_1 = arith.constant 0 : i32
    return %arg0, %c0_i32, %c0_i32_0 : i32, i32, i32
  }
}

</mosaic_0001>

<llo_original>
// kernel: preact_block_forward.2
$region0: #{preact_block_forward.2}
  #allocation0 [shape = 'u32[]', space=smem, size = 0x4, offset = 0x4, fixed_abs, tag = 'smem constant byte address 0x4 - core index']
  #allocation1 [shape = 'u32[72,128]{1,0:T(1,128)}', space=vmem, size = 0x9000, scoped, tag = 'internal scratch']
  %s0 = inlined_call_operand.vmem [shape: f32[2,4,256], index: 0, kind: input, shape index: {}]
  %s1 = inlined_call_operand.vmem [shape: f32[4,1], index: 1, kind: input, shape index: {}]
  %s2 = inlined_call_operand.vmem [shape: f32[4,1], index: 2, kind: input, shape index: {}]
  %s3 = inlined_call_operand.vmem [shape: f32[2,256], index: 3, kind: input, shape index: {}]
  %s4 = inlined_call_operand.vmem [shape: f32[4,36], index: 4, kind: input, shape index: {}]
  %s5 = inlined_call_operand.vmem [shape: f32[2,4,256], index: 5, kind: output, shape index: {0}]
  %s6 = inlined_call_operand.vmem [shape: f32[2,4,2], index: 6, kind: output, shape index: {1}]
  %7 = xla_tuple %s5, %s6
  %s8 = sld [smem:[#allocation0]]
  $region61: #{preact_block_forward.2} parent=0
    _
  %s10 = ssub.s32 1, %s8
  %s11 = scalar_select 0, %s10, %s8
  loop: start=0, step=1, limit=4
  $region2: #{preact_block_forward.2} parent=0 // loop_pre_header
    _
  $region3: #{preact_block_forward.2} parent=0 // loop_header
    %s13 = sphi 0, %s17
    %p14 = scmp.ge.s32.totalorder %s13, 4
    %s23 = sphi 0, %s25
    %s26 = sphi 0, %s23
    %s27 = sphi 0, %s26
    %s43 = sphi 0, %s27
    %s47 = sphi 0, %s47
    %s49 = sphi 0, %s47
    %s50 = sphi 0, %s49
    %s64 = sphi 0, %s50
    %s68 = sphi 0, %s68
    %s70 = sphi 0, %s68
    %s71 = sphi 0, %s70
    %s85 = sphi 0, %s71
    %s89 = sphi 0, %s89
    %s91 = sphi 0, %s89
    %s92 = sphi 0, %s91
    %s106 = sphi 0, %s92
    %s110 = sphi 0, %s110
    %s112 = sphi 0, %s110
    %s113 = sphi 0, %s112
    %s127 = sphi 0, %s113
    %s133 = sphi 0, %s135
    %s136 = sphi 0, %s133
    %s137 = sphi 0, %s136
    %s153 = sphi 0, %s137
    %s159 = sphi 0, %s161
    %s162 = sphi 0, %s159
    %s163 = sphi 0, %s162
    %s179 = sphi 0, %s163
  $region4: #{preact_block_forward.2} parent=0 // loop_header_branch
    %16 = sbr.rel (%p14) target = $region8
  $region5: #{preact_block_forward.2} parent=0 // loop_body
    %s18 = ssub.s32 %s13, 1
    %s19 = ssub.s32 %s13, 2
    %s20 = sadd.s32 %s13, 1
    %s21 = ssub.s32 %s13, %s20
    %p22 = scmp.eq.s32.totalorder %s21, 0
    %s24 = sadd.s32 %s23, 1
    %s25 = scalar_select %p22, %s23, %s24
    %p28 = pneg %p22
    %p29 = scmp.eq.s32.totalorder %s13, 1
    %p30 = por %p28, %p29
    %p31 = scmp.ne.s32.totalorder %s23, %s26
    %p32 = scmp.eq.s32.totalorder %s13, 0
    %p33 = por %p31, %p32
    %p34 = scmp.ne.s32.totalorder %s23, %s26
    %p35 = scmp.eq.s32.totalorder %s18, 1
    %p36 = por %p34, %p35
    %p37 = scmp.ne.s32.totalorder %s26, %s27
    %p38 = scmp.eq.s32.totalorder %s18, 0
    %p39 = por %p37, %p38
    %p40 = scmp.ne.s32.totalorder %s26, %s27
    %p41 = scmp.eq.s32.totalorder %s19, 1
    %p42 = por %p40, %p41
    %p44 = scmp.ne.s32.totalorder %s27, %s43
    %p45 = scmp.eq.s32.totalorder %s19, 0
    %p46 = por %p44, %p45
    %s48 = sadd.s32 %s47, 1
    %p51 = scmp.eq.s32.totalorder %s13, 1
    %p52 = scmp.ne.s32.totalorder %s47, %s49
    %p53 = scmp.eq.s32.totalorder %s13, 0
    %p54 = por %p52, %p53
    %p55 = scmp.ne.s32.totalorder %s47, %s49
    %p56 = scmp.eq.s32.totalorder %s18, 1
    %p57 = por %p55, %p56
    %p58 = scmp.ne.s32.totalorder %s49, %s50
    %p59 = scmp.eq.s32.totalorder %s18, 0
    %p60 = por %p58, %p59
    %p61 = scmp.ne.s32.totalorder %s49, %s50
    %p62 = scmp.eq.s32.totalorder %s19, 1
    %p63 = por %p61, %p62
    %p65 = scmp.ne.s32.totalorder %s50, %s64
    %p66 = scmp.eq.s32.totalorder %s19, 0
    %p67 = por %p65, %p66
    %s69 = sadd.s32 %s68, 1
    %p72 = scmp.eq.s32.totalorder %s13, 1
    %p73 = scmp.ne.s32.totalorder %s68, %s70
    %p74 = scmp.eq.s32.totalorder %s13, 0
    %p75 = por %p73, %p74
    %p76 = scmp.ne.s32.totalorder %s68, %s70
    %p77 = scmp.eq.s32.totalorder %s18, 1
    %p78 = por %p76, %p77
    %p79 = scmp.ne.s32.totalorder %s70, %s71
    %p80 = scmp.eq.s32.totalorder %s18, 0
    %p81 = por %p79, %p80
    %p82 = scmp.ne.s32.totalorder %s70, %s71
    %p83 = scmp.eq.s32.totalorder %s19, 1
    %p84 = por %p82, %p83
    %p86 = scmp.ne.s32.totalorder %s71, %s85
    %p87 = scmp.eq.s32.totalorder %s19, 0
    %p88 = por %p86, %p87
    %s90 = sadd.s32 %s89, 1
    %p93 = scmp.eq.s32.totalorder %s13, 1
    %p94 = scmp.ne.s32.totalorder %s89, %s91
    %p95 = scmp.eq.s32.totalorder %s13, 0
    %p96 = por %p94, %p95
    %p97 = scmp.ne.s32.totalorder %s89, %s91
    %p98 = scmp.eq.s32.totalorder %s18, 1
    %p99 = por %p97, %p98
    %p100 = scmp.ne.s32.totalorder %s91, %s92
    %p101 = scmp.eq.s32.totalorder %s18, 0
    %p102 = por %p100, %p101
    %p103 = scmp.ne.s32.totalorder %s91, %s92
    %p104 = scmp.eq.s32.totalorder %s19, 1
    %p105 = por %p103, %p104
    %p107 = scmp.ne.s32.totalorder %s92, %s106
    %p108 = scmp.eq.s32.totalorder %s19, 0
    %p109 = por %p107, %p108
    %s111 = sadd.s32 %s110, 1
    %p114 = scmp.eq.s32.totalorder %s13, 1
    %p115 = scmp.ne.s32.totalorder %s110, %s112
    %p116 = scmp.eq.s32.totalorder %s13, 0
    %p117 = por %p115, %p116
    %p118 = scmp.ne.s32.totalorder %s110, %s112
    %p119 = scmp.eq.s32.totalorder %s18, 1
    %p120 = por %p118, %p119
    %p121 = scmp.ne.s32.totalorder %s112, %s113
    %p122 = scmp.eq.s32.totalorder %s18, 0
    %p123 = por %p121, %p122
    %p124 = scmp.ne.s32.totalorder %s112, %s113
    %p125 = scmp.eq.s32.totalorder %s19, 1
    %p126 = por %p124, %p125
    %p128 = scmp.ne.s32.totalorder %s113, %s127
    %p129 = scmp.eq.s32.totalorder %s19, 0
    %p130 = por %p128, %p129
    %s131 = ssub.s32 %s13, %s20
    %p132 = scmp.eq.s32.totalorder %s131, 0
    %s134 = sadd.s32 %s133, 1
    %s135 = scalar_select %p132, %s133, %s134
    %p138 = pneg %p132
    %p139 = scmp.eq.s32.totalorder %s13, 1
    %p140 = por %p138, %p139
    %p141 = scmp.ne.s32.totalorder %s133, %s136
    %p142 = scmp.eq.s32.totalorder %s13, 0
    %p143 = por %p141, %p142
    %p144 = scmp.ne.s32.totalorder %s133, %s136
    %p145 = scmp.eq.s32.totalorder %s18, 1
    %p146 = por %p144, %p145
    %p147 = scmp.ne.s32.totalorder %s136, %s137
    %p148 = scmp.eq.s32.totalorder %s18, 0
    %p149 = por %p147, %p148
    %p150 = scmp.ne.s32.totalorder %s136, %s137
    %p151 = scmp.eq.s32.totalorder %s19, 1
    %p152 = por %p150, %p151
    %p154 = scmp.ne.s32.totalorder %s137, %s153
    %p155 = scmp.eq.s32.totalorder %s19, 0
    %p156 = por %p154, %p155
    %s157 = ssub.s32 %s13, %s20
    %p158 = scmp.eq.s32.totalorder %s157, 0
    %s160 = sadd.s32 %s159, 1
    %s161 = scalar_select %p158, %s159, %s160
    %p164 = pneg %p158
    %p165 = scmp.eq.s32.totalorder %s13, 1
    %p166 = por %p164, %p165
    %p167 = scmp.ne.s32.totalorder %s159, %s162
    %p168 = scmp.eq.s32.totalorder %s13, 0
    %p169 = por %p167, %p168
    %p170 = scmp.ne.s32.totalorder %s159, %s162
    %p171 = scmp.eq.s32.totalorder %s18, 1
    %p172 = por %p170, %p171
    %p173 = scmp.ne.s32.totalorder %s162, %s163
    %p174 = scmp.eq.s32.totalorder %s18, 0
    %p175 = por %p173, %p174
    %p176 = scmp.ne.s32.totalorder %s162, %s163
    %p177 = scmp.eq.s32.totalorder %s19, 1
    %p178 = por %p176, %p177
    %p180 = scmp.ne.s32.totalorder %s163, %s179
    %p181 = scmp.eq.s32.totalorder %s19, 0
    %p182 = por %p180, %p181
    %p183 = scmp.le.s32.totalorder 1, %s13
    %p184 = scmp.lt.s32.totalorder %s13, 3
    %p185 = pnand %p183, %p184
    %p186 = pneg %p185
    // Predicated region
    $region9: #{preact_block_forward.2} parent=5 // pred_check
      _
    $region10: #{preact_block_forward.2} parent=5 // pred_check_branch
      %188 = sbr.rel (%p185) target = $region12
    $region11: #{preact_block_forward.2} parent=5 // pred_region
      %s189 = ssub.s32 %s13, 1
      // Predicated region
      $region13: #{preact_block_forward.2} parent=11 // pred_check
        %p190 = pneg %p60
      $region14: #{preact_block_forward.2} parent=11 // pred_check_branch
        %192 = sbr.rel (%p190) target = $region16
      $region15: #{preact_block_forward.2} parent=11 // pred_region
        _
      $region16: #{preact_block_forward.2} parent=11 // pred_fallthru
        _
      // Predicated region
      $region17: #{preact_block_forward.2} parent=11 // pred_check
        %p193 = pneg %p81
      $region18: #{preact_block_forward.2} parent=11 // pred_check_branch
        %195 = sbr.rel (%p193) target = $region20
      $region19: #{preact_block_forward.2} parent=11 // pred_region
        _
      $region20: #{preact_block_forward.2} parent=11 // pred_fallthru
        _
      // Predicated region
      $region21: #{preact_block_forward.2} parent=11 // pred_check
        %p196 = pneg %p102
      $region22: #{preact_block_forward.2} parent=11 // pred_check_branch
        %198 = sbr.rel (%p196) target = $region24
      $region23: #{preact_block_forward.2} parent=11 // pred_region
        _
      $region24: #{preact_block_forward.2} parent=11 // pred_fallthru
        _
      // Predicated region
      $region25: #{preact_block_forward.2} parent=11 // pred_check
        %p199 = pneg %p123
      $region26: #{preact_block_forward.2} parent=11 // pred_check_branch
        %201 = sbr.rel (%p199) target = $region28
      $region27: #{preact_block_forward.2} parent=11 // pred_region
        _
      $region28: #{preact_block_forward.2} parent=11 // pred_fallthru
        _
    $region12: #{preact_block_forward.2} parent=5 // pred_fallthru
      _
    %p202 = scmp.lt.s32.totalorder %s13, 2
    // Predicated region
    $region29: #{preact_block_forward.2} parent=5 // pred_check
      %p203 = pneg %p202
    $region30: #{preact_block_forward.2} parent=5 // pred_check_branch
      %205 = sbr.rel (%p203) target = $region32
    $region31: #{preact_block_forward.2} parent=5 // pred_region
      // Predicated region
      $region33: #{preact_block_forward.2} parent=31 // pred_check
        %p206 = pneg %p33
      $region34: #{preact_block_forward.2} parent=31 // pred_check_branch
        %208 = sbr.rel (%p206) target = $region36
      $region35: #{preact_block_forward.2} parent=31 // pred_region
        %p209 = scmp.lt.s32.totalorder %s13, 1
        %s210 = scalar_select %p209, %s13, 1
        %s211 = smul.addr %s210, 2
        %s212 = smul.addr %s211, 4
        %s213 = scalar_lea.vmem %s0, %s212
      $region36: #{preact_block_forward.2} parent=31 // pred_fallthru
        _
    $region32: #{preact_block_forward.2} parent=5 // pred_fallthru
      _
    %p214 = scmp.le.s32.totalorder 1, %s13
    %p215 = scmp.lt.s32.totalorder %s13, 3
    %p216 = pnand %p214, %p215
    %p217 = pneg %p216
    // Predicated region
    $region37: #{preact_block_forward.2} parent=5 // pred_check
      _
    $region38: #{preact_block_forward.2} parent=5 // pred_check_branch
      %219 = sbr.rel (%p216) target = $region40
    $region39: #{preact_block_forward.2} parent=5 // pred_region
      %s220 = ssub.s32 %s13, 1
      %p221 = scmp.lt.s32.totalorder %s18, 1
      %s222 = scalar_select %p221, %s18, 1
      %s223 = smul.addr %s222, 2
      %s224 = smul.addr %s223, 4
      %s225 = scalar_lea.vmem %s0, %s224
      %p226 = pneg %p39
      %p227 = pneg %p36
      %p228 = pneg %p60
      %p229 = pneg %p57
      %p230 = pneg %p81
      %p231 = pneg %p78
      %p232 = pneg %p102
      %p233 = pneg %p99
      %p234 = pneg %p123
      %p235 = pneg %p120
      %p236 = pneg %p149
      %p237 = pneg %p146
      %p238 = scmp.lt.s32.totalorder %s18, 1
      %s239 = scalar_select %p238, %s18, 1
      %s240 = smul.addr %s239, 2
      %s241 = smul.addr %s240, 4
      %s242 = scalar_lea.vmem %s5, %s241
      %p243 = pneg %p175
      %p244 = pneg %p172
      %p245 = scmp.lt.s32.totalorder %s18, 1
      %s246 = scalar_select %p245, %s18, 1
      %s247 = smul.addr %s246, 4
      %s248 = scalar_lea.vmem %s6, %s247
      %p249 = scmp.lt.s32.totalorder %s18, 1
      %s250 = scalar_select %p249, %s18, 1
      %s251 = smul.addr %s250, 2
      %s252 = smul.addr %s251, 4
      %s253 = scalar_lea.vmem %s0, %s252
      %p254 = scmp.lt.s32.totalorder %s18, 1
      %s255 = scalar_select %p254, %s18, 1
      %s256 = smul.addr %s255, 2
      %s257 = smul.addr %s256, 4
      %s258 = scalar_lea.vmem %s5, %s257
      %p259 = scmp.lt.s32.totalorder %s18, 1
      %s260 = scalar_select %p259, %s18, 1
      %s261 = smul.addr %s260, 4
      %s262 = scalar_lea.vmem %s6, %s261
      %v263 = vld [vmem:[%s253] sm:$0xff]
      %v264 = vld [vmem:[%s1] sm:$0xf]
      %266 = vset.pattern.permute.xlu0 0
      %267 = vperm.xlu0 %266, %v264
      %v268 = vpop.permute.xlu0 %267
      %v270 = vunpack.c.l.s4 839922192
      %v271 = vunpack.c.0.s8 %v270
      %v272 = vperm.slane %v268, %v271
      %v274 = vmul.f32 %v263, %v272
      %v275 = vld [vmem:[%s2] sm:$0xf]
      %277 = vset.pattern.permute.xlu0 0
      %278 = vperm.xlu0 %277, %v275
      %v279 = vpop.permute.xlu0 %278
      %v281 = vunpack.c.l.s4 839922192
      %v282 = vunpack.c.0.s8 %v281
      %v283 = vperm.slane %v279, %v282
      %v285 = vadd.f32 %v274, %v283
      %v286 = vmax.f32 %v285, 0.0
      %v287 = vld [vmem:[%s4] sm:$0xf]
      %v288 = vld [vmem:[%s3] sm:$0xf]
      %290 = vst [vmem:[#allocation1] ss:$2 sm:$0xff] %v286
      %v291 = vld.sshfl [vmem:[#allocation1] sm:$0xff pattern:$0x75316420]
      %v292 = vld.sshfl [vmem:[#allocation1 + $0x8] sm:$0xff pattern:$0x75316420]
      %293 = vrot.lane.b32.xlu0 %v291, 17
      %v294 = vpop.permute.xlu0 %293
      %295 = vrot.lane.b32.xlu0 %v292, 17
      %v296 = vpop.permute.xlu0 %295
      %vm297 = vcmask 138240
      %v298 = vsel %vm297, %v294, %v296
      %v302 = vsel %vm297, 0.0, %v294
      %v303 = vsel %vm297, %v296, 0.0
      %v305 = vperm.slane %v288, 0
      %v306 = vperm.slane %v288, 2
      %v309 = vperm.slane %v305, 0
      %v310 = vperm.slane %v306, 0
      %v311 = vmul.f32 %v302, %v309
      %v312 = vmul.f32 %v298, %v310
      %v313 = vperm.slane %v288, 1
      %v314 = vperm.slane %v288, 3
      %v317 = vperm.slane %v313, 1
      %v318 = vperm.slane %v314, 1
      %321 = vrot.lane.b32.xlu0 %v317, 2
      %v322 = vpop.permute.xlu0 %321
      %323 = vrot.lane.b32.xlu0 %v318, 2
      %v324 = vpop.permute.xlu0 %323
      %vm325 = vcmask 15360
      %v326 = vsel %vm325, %v322, %v324
      %v330 = vmul.f32 %v302, %v322
      %v331 = vmul.f32 %v298, %v326
      %v332 = vmul.f32 %v303, %v324
      %335 = vrot.lane.b32.xlu0 %v309, 16
      %v336 = vpop.permute.xlu0 %335
      %337 = vrot.lane.b32.xlu0 %v310, 16
      %v338 = vpop.permute.xlu0 %337
      %vm339 = vcmask 130048
      %v340 = vsel %vm339, %v336, %v338
      %v344 = vmul.f32 %v302, %v336
      %v345 = vmul.f32 %v298, %v340
      %v346 = vmul.f32 %v303, %v338
      %347 = vrot.lane.b32.xlu0 %v317, 18
      %v348 = vpop.permute.xlu0 %347
      %349 = vrot.lane.b32.xlu0 %v318, 18
      %v350 = vpop.permute.xlu0 %349
      %vm351 = vcmask 146432
      %v352 = vsel %vm351, %v348, %v350
      %v356 = vmul.f32 %v302, %v348
      %v357 = vmul.f32 %v298, %v352
      %v358 = vmul.f32 %v303, %v350
      %359 = vrot.lane.b32.xlu0 %v309, 32
      %v360 = vpop.permute.xlu0 %359
      %361 = vrot.lane.b32.xlu0 %v310, 32
      %v362 = vpop.permute.xlu0 %361
      %vm363 = vcmask 261120
      %v364 = vsel %vm363, %v360, %v362
      %v368 = vmul.f32 %v302, %v360
      %v369 = vmul.f32 %v298, %v364
      %v370 = vmul.f32 %v303, %v362
      %371 = vrot.lane.b32.xlu0 %v317, 34
      %v372 = vpop.permute.xlu0 %371
      %373 = vrot.lane.b32.xlu0 %v318, 34
      %v374 = vpop.permute.xlu0 %373
      %vm375 = vcmask 277504
      %v376 = vsel %vm375, %v372, %v374
      %v380 = vmul.f32 %v302, %v372
      %v381 = vmul.f32 %v298, %v376
      %v382 = vmul.f32 %v303, %v374
      %v385 = vrot.slane %v302, 4
      %v386 = vrot.slane %v298, 4
      %v387 = vrot.slane %v303, 4
      %388 = vrot.lane.b32.xlu0 %v385, 127
      %v389 = vpop.permute.xlu0 %388
      %390 = vrot.lane.b32.xlu0 %v386, 127
      %v391 = vpop.permute.xlu0 %390
      %392 = vrot.lane.b32.xlu0 %v387, 127
      %v393 = vpop.permute.xlu0 %392
      %vm394 = vcmask 1039360
      %v395 = vsel %vm394, %v389, %v391
      %v396 = vsel %vm394, %v391, %v393
      %402 = vrot.lane.b32.xlu0 %v330, 126
      %v403 = vpop.permute.xlu0 %402
      %404 = vrot.lane.b32.xlu0 %v331, 126
      %v405 = vpop.permute.xlu0 %404
      %406 = vrot.lane.b32.xlu0 %v332, 126
      %v407 = vpop.permute.xlu0 %406
      %vm408 = vcmask 1031168
      %v409 = vsel %vm408, %v403, %v405
      %v410 = vsel %vm408, %v405, %v407
      %v416 = vrot.slane %v344, 4
      %v417 = vrot.slane %v345, 4
      %v418 = vrot.slane %v346, 4
      %419 = vrot.lane.b32.xlu0 %v416, 112
      %v420 = vpop.permute.xlu0 %419
      %421 = vrot.lane.b32.xlu0 %v417, 112
      %v422 = vpop.permute.xlu0 %421
      %423 = vrot.lane.b32.xlu0 %v418, 112
      %v424 = vpop.permute.xlu0 %423
      %vm425 = vcmask 916480
      %v426 = vsel %vm425, %v420, %v422
      %v427 = vsel %vm425, %v422, %v424
      %430 = vrot.lane.b32.xlu0 %v302, 111
      %v431 = vpop.permute.xlu0 %430
      %432 = vrot.lane.b32.xlu0 %v298, 111
      %v433 = vpop.permute.xlu0 %432
      %434 = vrot.lane.b32.xlu0 %v303, 111
      %v435 = vpop.permute.xlu0 %434
      %vm436 = vcmask 908288
      %v437 = vsel %vm436, %v431, %v433
      %v438 = vsel %vm436, %v433, %v435
      %v444 = vrot.slane %v356, 4
      %v445 = vrot.slane %v357, 4
      %v446 = vrot.slane %v358, 4
      %447 = vrot.lane.b32.xlu0 %v444, 110
      %v448 = vpop.permute.xlu0 %447
      %449 = vrot.lane.b32.xlu0 %v445, 110
      %v450 = vpop.permute.xlu0 %449
      %451 = vrot.lane.b32.xlu0 %v446, 110
      %v452 = vpop.permute.xlu0 %451
      %vm453 = vcmask 900096
      %v454 = vsel %vm453, %v448, %v450
      %v455 = vsel %vm453, %v450, %v452
      %461 = vrot.lane.b32.xlu0 %v368, 96
      %v462 = vpop.permute.xlu0 %461
      %463 = vrot.lane.b32.xlu0 %v369, 96
      %v464 = vpop.permute.xlu0 %463
      %465 = vrot.lane.b32.xlu0 %v370, 96
      %v466 = vpop.permute.xlu0 %465
      %vm467 = vcmask 785408
      %v468 = vsel %vm467, %v462, %v464
      %v469 = vsel %vm467, %v464, %v466
      %472 = vrot.lane.b32.xlu0 %v385, 95
      %v473 = vpop.permute.xlu0 %472
      %474 = vrot.lane.b32.xlu0 %v386, 95
      %v475 = vpop.permute.xlu0 %474
      %476 = vrot.lane.b32.xlu0 %v387, 95
      %v477 = vpop.permute.xlu0 %476
      %vm478 = vcmask 777216
      %v479 = vsel %vm478, %v473, %v475
      %v480 = vsel %vm478, %v475, %v477
      %486 = vrot.lane.b32.xlu0 %v380, 94
      %v487 = vpop.permute.xlu0 %486
      %488 = vrot.lane.b32.xlu0 %v381, 94
      %v489 = vpop.permute.xlu0 %488
      %490 = vrot.lane.b32.xlu0 %v382, 94
      %v491 = vpop.permute.xlu0 %490
      %vm492 = vcmask 769024
      %v493 = vsel %vm492, %v487, %v489
      %v494 = vsel %vm492, %v489, %v491
      %vm495 = vcmask 1043456
      %v496 = vsel %vm495, %v311, %v395
      %v497 = vsel %vm495, %v312, %v396
      %v498 = vsel %vm495, %v409, %v426
      %v499 = vsel %vm495, %v410, %v427
      %v500 = vsel %vm495, %v437, %v454
      %v501 = vsel %vm495, %v438, %v455
      %v502 = vsel %vm495, %v468, %v479
      %v503 = vsel %vm495, %v469, %v480
      %vm504 = vcmask 293888
      %v506 = vsel %vm504, %v287, 0
      %v508 = vsel %vm495, %v493, 0
      %v510 = vsel %vm495, %v494, 0
      %512 = vmatpush.msra.mxu0 0.0
      %513 = vmatpush.msra.mxu0 0.0
      %514 = vmatpush.msra.mxu0 0.0
      %515 = vmatpush.msra.mxu0 0.0
      %516 = vmatpush.msra.mxu0 0.0
      %517 = vmatpush.msra.mxu0 0.0
      %518 = vmatpush.msra.mxu0 0.0
      %519 = vmatpush.msra.mxu0 0.0
      %520 = vmatpush.msra.mxu0 0.0
      %521 = vmatpush.msra.mxu0 0.0
      %522 = vmatpush.msra.mxu0 0.0
      %523 = vmatpush.msra.mxu0 %v508
      %524 = vmatpush.msra.mxu0 %v502
      %525 = vmatpush.msra.mxu0 %v500
      %526 = vmatpush.msra.mxu0 %v498
      %527 = vmatpush.msra.mxu0 %v496
      %528 = vmatmul.f32.gmra.mxu0 %v506
      %v529 = vpop.f32.mrf.mxu0
      %v530 = vadd.f32 0.0, %v529
      %531 = vdwg.mxu0
      %532 = vmatpush.msra.mxu0 0.0
      %533 = vmatpush.msra.mxu0 0.0
      %534 = vmatpush.msra.mxu0 0.0
      %535 = vmatpush.msra.mxu0 0.0
      %536 = vmatpush.msra.mxu0 0.0
      %537 = vmatpush.msra.mxu0 0.0
      %538 = vmatpush.msra.mxu0 0.0
      %539 = vmatpush.msra.mxu0 0.0
      %540 = vmatpush.msra.mxu0 0.0
      %541 = vmatpush.msra.mxu0 0.0
      %542 = vmatpush.msra.mxu0 0.0
      %543 = vmatpush.msra.mxu0 %v510
      %544 = vmatpush.msra.mxu0 %v503
      %545 = vmatpush.msra.mxu0 %v501
      %546 = vmatpush.msra.mxu0 %v499
      %547 = vmatpush.msra.mxu0 %v497
      %548 = vmatmul.f32.gmra.mxu0 %v506
      %v549 = vpop.f32.mrf.mxu0
      %v550 = vadd.f32 0.0, %v549
      %551 = vdwg.mxu0
      %v554 = vrot.slane %v550, 4
      %v555 = vsel %vm495, %v530, %v554
      %557 = vst [vmem:[%s258] sm:$0xff] %v555
      %v558 = vsel %vm495, %v530, 0.0
      %v559 = vsel %vm495, %v550, 0.0
      %v560 = vadd.f32 %v558, %v559
      %561 = vadd.xlane.f32.xlu0 %v560
      %v562 = vpop.xlane.xlu0 %561
      %v563 = vmul.f32 %v530, %v530
      %v564 = vmul.f32 %v550, %v550
      %v565 = vsel %vm495, %v563, 0.0
      %v566 = vsel %vm495, %v564, 0.0
      %v567 = vadd.f32 %v565, %v566
      %568 = vadd.xlane.f32.xlu0 %v567
      %v569 = vpop.xlane.xlu0 %568
      %vm570 = vcmask 7168
      %v571 = vsel %vm570, %v562, %v569
      %vm572 = vcmask 11264
      %573 = vst.msk [vmem:[%s262] sm:$0xf] %vm572, %v571
      %p574 = scmp.lt.s32.totalorder %s18, 1
      %s575 = scalar_select %p574, %s18, 1
      %s576 = smul.addr %s575, 2
      %s577 = smul.addr %s576, 4
      %s578 = scalar_lea.vmem %s5, %s577
      %p579 = scmp.lt.s32.totalorder %s18, 1
      %s580 = scalar_select %p579, %s18, 1
      %s581 = smul.addr %s580, 4
      %s582 = scalar_lea.vmem %s6, %s581
      // Predicated region
      $region41: #{preact_block_forward.2} parent=39 // pred_check
        %p583 = pneg %p146
      $region42: #{preact_block_forward.2} parent=39 // pred_check_branch
        %585 = sbr.rel (%p583) target = $region44
      $region43: #{preact_block_forward.2} parent=39 // pred_region
        _
      $region44: #{preact_block_forward.2} parent=39 // pred_fallthru
        _
      // Predicated region
      $region45: #{preact_block_forward.2} parent=39 // pred_check
        %p586 = pneg %p172
      $region46: #{preact_block_forward.2} parent=39 // pred_check_branch
        %588 = sbr.rel (%p586) target = $region48
      $region47: #{preact_block_forward.2} parent=39 // pred_region
        _
      $region48: #{preact_block_forward.2} parent=39 // pred_fallthru
        _
    $region40: #{preact_block_forward.2} parent=5 // pred_fallthru
      _
    %p589 = scmp.le.s32.totalorder 2, %s13
    // Predicated region
    $region49: #{preact_block_forward.2} parent=5 // pred_check
      %p590 = pneg %p589
    $region50: #{preact_block_forward.2} parent=5 // pred_check_branch
      %592 = sbr.rel (%p590) target = $region52
    $region51: #{preact_block_forward.2} parent=5 // pred_region
      %s593 = ssub.s32 %s13, 2
      // Predicated region
      $region53: #{preact_block_forward.2} parent=51 // pred_check
        %p594 = pneg %p152
      $region54: #{preact_block_forward.2} parent=51 // pred_check_branch
        %596 = sbr.rel (%p594) target = $region56
      $region55: #{preact_block_forward.2} parent=51 // pred_region
        %p597 = scmp.lt.s32.totalorder %s19, 1
        %s598 = scalar_select %p597, %s19, 1
        %s599 = smul.addr %s598, 2
        %s600 = smul.addr %s599, 4
        %s601 = scalar_lea.vmem %s5, %s600
      $region56: #{preact_block_forward.2} parent=51 // pred_fallthru
        _
      // Predicated region
      $region57: #{preact_block_forward.2} parent=51 // pred_check
        %p602 = pneg %p178
      $region58: #{preact_block_forward.2} parent=51 // pred_check_branch
        %604 = sbr.rel (%p602) target = $region60
      $region59: #{preact_block_forward.2} parent=51 // pred_region
        %p605 = scmp.lt.s32.totalorder %s19, 1
        %s606 = scalar_select %p605, %s19, 1
        %s607 = smul.addr %s606, 4
        %s608 = scalar_lea.vmem %s6, %s607
      $region60: #{preact_block_forward.2} parent=51 // pred_fallthru
        _
    $region52: #{preact_block_forward.2} parent=5 // pred_fallthru
      _
  $region6: #{preact_block_forward.2} parent=0 // loop_footer
    %s17 = sadd.s32 1, %s13
  $region7: #{preact_block_forward.2} parent=0 // loop_footer_branch
    %12 = sbr.rel target = $region3
  $region8: #{preact_block_forward.2} parent=0 // loop_exit
    _

// kernel: preact_block_forward.3
$region0: #{preact_block_forward.3}
  #allocation0 [shape = 'u32[]', space=smem, size = 0x4, offset = 0x4, fixed_abs, tag = 'smem constant byte address 0x4 - core index']
  #allocation1 [shape = 'u32[72,128]{1,0:T(1,128)}', space=vmem, size = 0x9000, scoped, tag = 'internal scratch']
  %s0 = inlined_call_operand.vmem [shape: f32[2,4,256], index: 0, kind: input, shape index: {}]
  %s1 = inlined_call_operand.vmem [shape: f32[4,1], index: 1, kind: input, shape index: {}]
  %s2 = inlined_call_operand.vmem [shape: f32[4,1], index: 2, kind: input, shape index: {}]
  %s3 = inlined_call_operand.vmem [shape: f32[2,256], index: 3, kind: input, shape index: {}]
  %s4 = inlined_call_operand.vmem [shape: f32[4,36], index: 4, kind: input, shape index: {}]
  %s5 = inlined_call_operand.vmem [shape: f32[2,4,256], index: 5, kind: input, shape index: {}]
  %s6 = inlined_call_operand.vmem [shape: f32[2,4,256], index: 6, kind: output, shape index: {}]
  %s7 = sld [smem:[#allocation0]]
  $region57: #{preact_block_forward.3} parent=0
    _
  %s9 = ssub.s32 1, %s7
  %s10 = scalar_select 0, %s9, %s7
  loop: start=0, step=1, limit=4
  $region2: #{preact_block_forward.3} parent=0 // loop_pre_header
    _
  $region3: #{preact_block_forward.3} parent=0 // loop_header
    %s12 = sphi 0, %s16
    %p13 = scmp.ge.s32.totalorder %s12, 4
    %s22 = sphi 0, %s24
    %s25 = sphi 0, %s22
    %s26 = sphi 0, %s25
    %s42 = sphi 0, %s26
    %s46 = sphi 0, %s46
    %s48 = sphi 0, %s46
    %s49 = sphi 0, %s48
    %s63 = sphi 0, %s49
    %s67 = sphi 0, %s67
    %s69 = sphi 0, %s67
    %s70 = sphi 0, %s69
    %s84 = sphi 0, %s70
    %s88 = sphi 0, %s88
    %s90 = sphi 0, %s88
    %s91 = sphi 0, %s90
    %s105 = sphi 0, %s91
    %s109 = sphi 0, %s109
    %s111 = sphi 0, %s109
    %s112 = sphi 0, %s111
    %s126 = sphi 0, %s112
    %s132 = sphi 0, %s134
    %s135 = sphi 0, %s132
    %s136 = sphi 0, %s135
    %s152 = sphi 0, %s136
    %s158 = sphi 0, %s160
    %s161 = sphi 0, %s158
    %s162 = sphi 0, %s161
    %s178 = sphi 0, %s162
  $region4: #{preact_block_forward.3} parent=0 // loop_header_branch
    %15 = sbr.rel (%p13) target = $region8
  $region5: #{preact_block_forward.3} parent=0 // loop_body
    %s17 = ssub.s32 %s12, 1
    %s18 = ssub.s32 %s12, 2
    %s19 = sadd.s32 %s12, 1
    %s20 = ssub.s32 %s12, %s19
    %p21 = scmp.eq.s32.totalorder %s20, 0
    %s23 = sadd.s32 %s22, 1
    %s24 = scalar_select %p21, %s22, %s23
    %p27 = pneg %p21
    %p28 = scmp.eq.s32.totalorder %s12, 1
    %p29 = por %p27, %p28
    %p30 = scmp.ne.s32.totalorder %s22, %s25
    %p31 = scmp.eq.s32.totalorder %s12, 0
    %p32 = por %p30, %p31
    %p33 = scmp.ne.s32.totalorder %s22, %s25
    %p34 = scmp.eq.s32.totalorder %s17, 1
    %p35 = por %p33, %p34
    %p36 = scmp.ne.s32.totalorder %s25, %s26
    %p37 = scmp.eq.s32.totalorder %s17, 0
    %p38 = por %p36, %p37
    %p39 = scmp.ne.s32.totalorder %s25, %s26
    %p40 = scmp.eq.s32.totalorder %s18, 1
    %p41 = por %p39, %p40
    %p43 = scmp.ne.s32.totalorder %s26, %s42
    %p44 = scmp.eq.s32.totalorder %s18, 0
    %p45 = por %p43, %p44
    %s47 = sadd.s32 %s46, 1
    %p50 = scmp.eq.s32.totalorder %s12, 1
    %p51 = scmp.ne.s32.totalorder %s46, %s48
    %p52 = scmp.eq.s32.totalorder %s12, 0
    %p53 = por %p51, %p52
    %p54 = scmp.ne.s32.totalorder %s46, %s48
    %p55 = scmp.eq.s32.totalorder %s17, 1
    %p56 = por %p54, %p55
    %p57 = scmp.ne.s32.totalorder %s48, %s49
    %p58 = scmp.eq.s32.totalorder %s17, 0
    %p59 = por %p57, %p58
    %p60 = scmp.ne.s32.totalorder %s48, %s49
    %p61 = scmp.eq.s32.totalorder %s18, 1
    %p62 = por %p60, %p61
    %p64 = scmp.ne.s32.totalorder %s49, %s63
    %p65 = scmp.eq.s32.totalorder %s18, 0
    %p66 = por %p64, %p65
    %s68 = sadd.s32 %s67, 1
    %p71 = scmp.eq.s32.totalorder %s12, 1
    %p72 = scmp.ne.s32.totalorder %s67, %s69
    %p73 = scmp.eq.s32.totalorder %s12, 0
    %p74 = por %p72, %p73
    %p75 = scmp.ne.s32.totalorder %s67, %s69
    %p76 = scmp.eq.s32.totalorder %s17, 1
    %p77 = por %p75, %p76
    %p78 = scmp.ne.s32.totalorder %s69, %s70
    %p79 = scmp.eq.s32.totalorder %s17, 0
    %p80 = por %p78, %p79
    %p81 = scmp.ne.s32.totalorder %s69, %s70
    %p82 = scmp.eq.s32.totalorder %s18, 1
    %p83 = por %p81, %p82
    %p85 = scmp.ne.s32.totalorder %s70, %s84
    %p86 = scmp.eq.s32.totalorder %s18, 0
    %p87 = por %p85, %p86
    %s89 = sadd.s32 %s88, 1
    %p92 = scmp.eq.s32.totalorder %s12, 1
    %p93 = scmp.ne.s32.totalorder %s88, %s90
    %p94 = scmp.eq.s32.totalorder %s12, 0
    %p95 = por %p93, %p94
    %p96 = scmp.ne.s32.totalorder %s88, %s90
    %p97 = scmp.eq.s32.totalorder %s17, 1
    %p98 = por %p96, %p97
    %p99 = scmp.ne.s32.totalorder %s90, %s91
    %p100 = scmp.eq.s32.totalorder %s17, 0
    %p101 = por %p99, %p100
    %p102 = scmp.ne.s32.totalorder %s90, %s91
    %p103 = scmp.eq.s32.totalorder %s18, 1
    %p104 = por %p102, %p103
    %p106 = scmp.ne.s32.totalorder %s91, %s105
    %p107 = scmp.eq.s32.totalorder %s18, 0
    %p108 = por %p106, %p107
    %s110 = sadd.s32 %s109, 1
    %p113 = scmp.eq.s32.totalorder %s12, 1
    %p114 = scmp.ne.s32.totalorder %s109, %s111
    %p115 = scmp.eq.s32.totalorder %s12, 0
    %p116 = por %p114, %p115
    %p117 = scmp.ne.s32.totalorder %s109, %s111
    %p118 = scmp.eq.s32.totalorder %s17, 1
    %p119 = por %p117, %p118
    %p120 = scmp.ne.s32.totalorder %s111, %s112
    %p121 = scmp.eq.s32.totalorder %s17, 0
    %p122 = por %p120, %p121
    %p123 = scmp.ne.s32.totalorder %s111, %s112
    %p124 = scmp.eq.s32.totalorder %s18, 1
    %p125 = por %p123, %p124
    %p127 = scmp.ne.s32.totalorder %s112, %s126
    %p128 = scmp.eq.s32.totalorder %s18, 0
    %p129 = por %p127, %p128
    %s130 = ssub.s32 %s12, %s19
    %p131 = scmp.eq.s32.totalorder %s130, 0
    %s133 = sadd.s32 %s132, 1
    %s134 = scalar_select %p131, %s132, %s133
    %p137 = pneg %p131
    %p138 = scmp.eq.s32.totalorder %s12, 1
    %p139 = por %p137, %p138
    %p140 = scmp.ne.s32.totalorder %s132, %s135
    %p141 = scmp.eq.s32.totalorder %s12, 0
    %p142 = por %p140, %p141
    %p143 = scmp.ne.s32.totalorder %s132, %s135
    %p144 = scmp.eq.s32.totalorder %s17, 1
    %p145 = por %p143, %p144
    %p146 = scmp.ne.s32.totalorder %s135, %s136
    %p147 = scmp.eq.s32.totalorder %s17, 0
    %p148 = por %p146, %p147
    %p149 = scmp.ne.s32.totalorder %s135, %s136
    %p150 = scmp.eq.s32.totalorder %s18, 1
    %p151 = por %p149, %p150
    %p153 = scmp.ne.s32.totalorder %s136, %s152
    %p154 = scmp.eq.s32.totalorder %s18, 0
    %p155 = por %p153, %p154
    %s156 = ssub.s32 %s12, %s19
    %p157 = scmp.eq.s32.totalorder %s156, 0
    %s159 = sadd.s32 %s158, 1
    %s160 = scalar_select %p157, %s158, %s159
    %p163 = pneg %p157
    %p164 = scmp.eq.s32.totalorder %s12, 1
    %p165 = por %p163, %p164
    %p166 = scmp.ne.s32.totalorder %s158, %s161
    %p167 = scmp.eq.s32.totalorder %s12, 0
    %p168 = por %p166, %p167
    %p169 = scmp.ne.s32.totalorder %s158, %s161
    %p170 = scmp.eq.s32.totalorder %s17, 1
    %p171 = por %p169, %p170
    %p172 = scmp.ne.s32.totalorder %s161, %s162
    %p173 = scmp.eq.s32.totalorder %s17, 0
    %p174 = por %p172, %p173
    %p175 = scmp.ne.s32.totalorder %s161, %s162
    %p176 = scmp.eq.s32.totalorder %s18, 1
    %p177 = por %p175, %p176
    %p179 = scmp.ne.s32.totalorder %s162, %s178
    %p180 = scmp.eq.s32.totalorder %s18, 0
    %p181 = por %p179, %p180
    %p182 = scmp.le.s32.totalorder 1, %s12
    %p183 = scmp.lt.s32.totalorder %s12, 3
    %p184 = pnand %p182, %p183
    %p185 = pneg %p184
    // Predicated region
    $region9: #{preact_block_forward.3} parent=5 // pred_check
      _
    $region10: #{preact_block_forward.3} parent=5 // pred_check_branch
      %187 = sbr.rel (%p184) target = $region12
    $region11: #{preact_block_forward.3} parent=5 // pred_region
      %s188 = ssub.s32 %s12, 1
      // Predicated region
      $region13: #{preact_block_forward.3} parent=11 // pred_check
        %p189 = pneg %p59
      $region14: #{preact_block_forward.3} parent=11 // pred_check_branch
        %191 = sbr.rel (%p189) target = $region16
      $region15: #{preact_block_forward.3} parent=11 // pred_region
        _
      $region16: #{preact_block_forward.3} parent=11 // pred_fallthru
        _
      // Predicated region
      $region17: #{preact_block_forward.3} parent=11 // pred_check
        %p192 = pneg %p80
      $region18: #{preact_block_forward.3} parent=11 // pred_check_branch
        %194 = sbr.rel (%p192) target = $region20
      $region19: #{preact_block_forward.3} parent=11 // pred_region
        _
      $region20: #{preact_block_forward.3} parent=11 // pred_fallthru
        _
      // Predicated region
      $region21: #{preact_block_forward.3} parent=11 // pred_check
        %p195 = pneg %p101
      $region22: #{preact_block_forward.3} parent=11 // pred_check_branch
        %197 = sbr.rel (%p195) target = $region24
      $region23: #{preact_block_forward.3} parent=11 // pred_region
        _
      $region24: #{preact_block_forward.3} parent=11 // pred_fallthru
        _
      // Predicated region
      $region25: #{preact_block_forward.3} parent=11 // pred_check
        %p198 = pneg %p122
      $region26: #{preact_block_forward.3} parent=11 // pred_check_branch
        %200 = sbr.rel (%p198) target = $region28
      $region27: #{preact_block_forward.3} parent=11 // pred_region
        _
      $region28: #{preact_block_forward.3} parent=11 // pred_fallthru
        _
    $region12: #{preact_block_forward.3} parent=5 // pred_fallthru
      _
    %p201 = scmp.lt.s32.totalorder %s12, 2
    // Predicated region
    $region29: #{preact_block_forward.3} parent=5 // pred_check
      %p202 = pneg %p201
    $region30: #{preact_block_forward.3} parent=5 // pred_check_branch
      %204 = sbr.rel (%p202) target = $region32
    $region31: #{preact_block_forward.3} parent=5 // pred_region
      // Predicated region
      $region33: #{preact_block_forward.3} parent=31 // pred_check
        %p205 = pneg %p32
      $region34: #{preact_block_forward.3} parent=31 // pred_check_branch
        %207 = sbr.rel (%p205) target = $region36
      $region35: #{preact_block_forward.3} parent=31 // pred_region
        %p208 = scmp.lt.s32.totalorder %s12, 1
        %s209 = scalar_select %p208, %s12, 1
        %s210 = smul.addr %s209, 2
        %s211 = smul.addr %s210, 4
        %s212 = scalar_lea.vmem %s0, %s211
      $region36: #{preact_block_forward.3} parent=31 // pred_fallthru
        _
      // Predicated region
      $region37: #{preact_block_forward.3} parent=31 // pred_check
        %p213 = pneg %p142
      $region38: #{preact_block_forward.3} parent=31 // pred_check_branch
        %215 = sbr.rel (%p213) target = $region40
      $region39: #{preact_block_forward.3} parent=31 // pred_region
        %p216 = scmp.lt.s32.totalorder %s12, 1
        %s217 = scalar_select %p216, %s12, 1
        %s218 = smul.addr %s217, 2
        %s219 = smul.addr %s218, 4
        %s220 = scalar_lea.vmem %s5, %s219
      $region40: #{preact_block_forward.3} parent=31 // pred_fallthru
        _
    $region32: #{preact_block_forward.3} parent=5 // pred_fallthru
      _
    %p221 = scmp.le.s32.totalorder 1, %s12
    %p222 = scmp.lt.s32.totalorder %s12, 3
    %p223 = pnand %p221, %p222
    %p224 = pneg %p223
    // Predicated region
    $region41: #{preact_block_forward.3} parent=5 // pred_check
      _
    $region42: #{preact_block_forward.3} parent=5 // pred_check_branch
      %226 = sbr.rel (%p223) target = $region44
    $region43: #{preact_block_forward.3} parent=5 // pred_region
      %s227 = ssub.s32 %s12, 1
      %p228 = scmp.lt.s32.totalorder %s17, 1
      %s229 = scalar_select %p228, %s17, 1
      %s230 = smul.addr %s229, 2
      %s231 = smul.addr %s230, 4
      %s232 = scalar_lea.vmem %s0, %s231
      %p233 = pneg %p38
      %p234 = pneg %p35
      %p235 = pneg %p59
      %p236 = pneg %p56
      %p237 = pneg %p80
      %p238 = pneg %p77
      %p239 = pneg %p101
      %p240 = pneg %p98
      %p241 = pneg %p122
      %p242 = pneg %p119
      %p243 = scmp.lt.s32.totalorder %s17, 1
      %s244 = scalar_select %p243, %s17, 1
      %s245 = smul.addr %s244, 2
      %s246 = smul.addr %s245, 4
      %s247 = scalar_lea.vmem %s5, %s246
      %p248 = pneg %p148
      %p249 = pneg %p145
      %p250 = pneg %p174
      %p251 = pneg %p171
      %p252 = scmp.lt.s32.totalorder %s17, 1
      %s253 = scalar_select %p252, %s17, 1
      %s254 = smul.addr %s253, 2
      %s255 = smul.addr %s254, 4
      %s256 = scalar_lea.vmem %s6, %s255
      %p257 = scmp.lt.s32.totalorder %s17, 1
      %s258 = scalar_select %p257, %s17, 1
      %s259 = smul.addr %s258, 2
      %s260 = smul.addr %s259, 4
      %s261 = scalar_lea.vmem %s0, %s260
      %p262 = scmp.lt.s32.totalorder %s17, 1
      %s263 = scalar_select %p262, %s17, 1
      %s264 = smul.addr %s263, 2
      %s265 = smul.addr %s264, 4
      %s266 = scalar_lea.vmem %s5, %s265
      %p267 = scmp.lt.s32.totalorder %s17, 1
      %s268 = scalar_select %p267, %s17, 1
      %s269 = smul.addr %s268, 2
      %s270 = smul.addr %s269, 4
      %s271 = scalar_lea.vmem %s6, %s270
      %v272 = vld [vmem:[%s261] sm:$0xff]
      %v273 = vld [vmem:[%s1] sm:$0xf]
      %275 = vset.pattern.permute.xlu0 0
      %276 = vperm.xlu0 %275, %v273
      %v277 = vpop.permute.xlu0 %276
      %v279 = vunpack.c.l.s4 839922192
      %v280 = vunpack.c.0.s8 %v279
      %v281 = vperm.slane %v277, %v280
      %v283 = vmul.f32 %v272, %v281
      %v284 = vld [vmem:[%s2] sm:$0xf]
      %286 = vset.pattern.permute.xlu0 0
      %287 = vperm.xlu0 %286, %v284
      %v288 = vpop.permute.xlu0 %287
      %v290 = vunpack.c.l.s4 839922192
      %v291 = vunpack.c.0.s8 %v290
      %v292 = vperm.slane %v288, %v291
      %v294 = vadd.f32 %v283, %v292
      %v295 = vmax.f32 %v294, 0.0
      %v296 = vld [vmem:[%s4] sm:$0xf]
      %v297 = vld [vmem:[%s3] sm:$0xf]
      %299 = vst [vmem:[#allocation1] ss:$2 sm:$0xff] %v295
      %v300 = vld.sshfl [vmem:[#allocation1] sm:$0xff pattern:$0x75316420]
      %v301 = vld.sshfl [vmem:[#allocation1 + $0x8] sm:$0xff pattern:$0x75316420]
      %302 = vrot.lane.b32.xlu0 %v300, 17
      %v303 = vpop.permute.xlu0 %302
      %304 = vrot.lane.b32.xlu0 %v301, 17
      %v305 = vpop.permute.xlu0 %304
      %vm306 = vcmask 138240
      %v307 = vsel %vm306, %v303, %v305
      %v311 = vsel %vm306, 0.0, %v303
      %v312 = vsel %vm306, %v305, 0.0
      %v314 = vperm.slane %v297, 0
      %v315 = vperm.slane %v297, 2
      %v318 = vperm.slane %v314, 0
      %v319 = vperm.slane %v315, 0
      %v320 = vmul.f32 %v311, %v318
      %v321 = vmul.f32 %v307, %v319
      %v322 = vperm.slane %v297, 1
      %v323 = vperm.slane %v297, 3
      %v326 = vperm.slane %v322, 1
      %v327 = vperm.slane %v323, 1
      %330 = vrot.lane.b32.xlu0 %v326, 2
      %v331 = vpop.permute.xlu0 %330
      %332 = vrot.lane.b32.xlu0 %v327, 2
      %v333 = vpop.permute.xlu0 %332
      %vm334 = vcmask 15360
      %v335 = vsel %vm334, %v331, %v333
      %v339 = vmul.f32 %v311, %v331
      %v340 = vmul.f32 %v307, %v335
      %v341 = vmul.f32 %v312, %v333
      %344 = vrot.lane.b32.xlu0 %v318, 16
      %v345 = vpop.permute.xlu0 %344
      %346 = vrot.lane.b32.xlu0 %v319, 16
      %v347 = vpop.permute.xlu0 %346
      %vm348 = vcmask 130048
      %v349 = vsel %vm348, %v345, %v347
      %v353 = vmul.f32 %v311, %v345
      %v354 = vmul.f32 %v307, %v349
      %v355 = vmul.f32 %v312, %v347
      %356 = vrot.lane.b32.xlu0 %v326, 18
      %v357 = vpop.permute.xlu0 %356
      %358 = vrot.lane.b32.xlu0 %v327, 18
      %v359 = vpop.permute.xlu0 %358
      %vm360 = vcmask 146432
      %v361 = vsel %vm360, %v357, %v359
      %v365 = vmul.f32 %v311, %v357
      %v366 = vmul.f32 %v307, %v361
      %v367 = vmul.f32 %v312, %v359
      %368 = vrot.lane.b32.xlu0 %v318, 32
      %v369 = vpop.permute.xlu0 %368
      %370 = vrot.lane.b32.xlu0 %v319, 32
      %v371 = vpop.permute.xlu0 %370
      %vm372 = vcmask 261120
      %v373 = vsel %vm372, %v369, %v371
      %v377 = vmul.f32 %v311, %v369
      %v378 = vmul.f32 %v307, %v373
      %v379 = vmul.f32 %v312, %v371
      %380 = vrot.lane.b32.xlu0 %v326, 34
      %v381 = vpop.permute.xlu0 %380
      %382 = vrot.lane.b32.xlu0 %v327, 34
      %v383 = vpop.permute.xlu0 %382
      %vm384 = vcmask 277504
      %v385 = vsel %vm384, %v381, %v383
      %v389 = vmul.f32 %v311, %v381
      %v390 = vmul.f32 %v307, %v385
      %v391 = vmul.f32 %v312, %v383
      %v394 = vrot.slane %v311, 4
      %v395 = vrot.slane %v307, 4
      %v396 = vrot.slane %v312, 4
      %397 = vrot.lane.b32.xlu0 %v394, 127
      %v398 = vpop.permute.xlu0 %397
      %399 = vrot.lane.b32.xlu0 %v395, 127
      %v400 = vpop.permute.xlu0 %399
      %401 = vrot.lane.b32.xlu0 %v396, 127
      %v402 = vpop.permute.xlu0 %401
      %vm403 = vcmask 1039360
      %v404 = vsel %vm403, %v398, %v400
      %v405 = vsel %vm403, %v400, %v402
      %411 = vrot.lane.b32.xlu0 %v339, 126
      %v412 = vpop.permute.xlu0 %411
      %413 = vrot.lane.b32.xlu0 %v340, 126
      %v414 = vpop.permute.xlu0 %413
      %415 = vrot.lane.b32.xlu0 %v341, 126
      %v416 = vpop.permute.xlu0 %415
      %vm417 = vcmask 1031168
      %v418 = vsel %vm417, %v412, %v414
      %v419 = vsel %vm417, %v414, %v416
      %v425 = vrot.slane %v353, 4
      %v426 = vrot.slane %v354, 4
      %v427 = vrot.slane %v355, 4
      %428 = vrot.lane.b32.xlu0 %v425, 112
      %v429 = vpop.permute.xlu0 %428
      %430 = vrot.lane.b32.xlu0 %v426, 112
      %v431 = vpop.permute.xlu0 %430
      %432 = vrot.lane.b32.xlu0 %v427, 112
      %v433 = vpop.permute.xlu0 %432
      %vm434 = vcmask 916480
      %v435 = vsel %vm434, %v429, %v431
      %v436 = vsel %vm434, %v431, %v433
      %439 = vrot.lane.b32.xlu0 %v311, 111
      %v440 = vpop.permute.xlu0 %439
      %441 = vrot.lane.b32.xlu0 %v307, 111
      %v442 = vpop.permute.xlu0 %441
      %443 = vrot.lane.b32.xlu0 %v312, 111
      %v444 = vpop.permute.xlu0 %443
      %vm445 = vcmask 908288
      %v446 = vsel %vm445, %v440, %v442
      %v447 = vsel %vm445, %v442, %v444
      %v453 = vrot.slane %v365, 4
      %v454 = vrot.slane %v366, 4
      %v455 = vrot.slane %v367, 4
      %456 = vrot.lane.b32.xlu0 %v453, 110
      %v457 = vpop.permute.xlu0 %456
      %458 = vrot.lane.b32.xlu0 %v454, 110
      %v459 = vpop.permute.xlu0 %458
      %460 = vrot.lane.b32.xlu0 %v455, 110
      %v461 = vpop.permute.xlu0 %460
      %vm462 = vcmask 900096
      %v463 = vsel %vm462, %v457, %v459
      %v464 = vsel %vm462, %v459, %v461
      %470 = vrot.lane.b32.xlu0 %v377, 96
      %v471 = vpop.permute.xlu0 %470
      %472 = vrot.lane.b32.xlu0 %v378, 96
      %v473 = vpop.permute.xlu0 %472
      %474 = vrot.lane.b32.xlu0 %v379, 96
      %v475 = vpop.permute.xlu0 %474
      %vm476 = vcmask 785408
      %v477 = vsel %vm476, %v471, %v473
      %v478 = vsel %vm476, %v473, %v475
      %481 = vrot.lane.b32.xlu0 %v394, 95
      %v482 = vpop.permute.xlu0 %481
      %483 = vrot.lane.b32.xlu0 %v395, 95
      %v484 = vpop.permute.xlu0 %483
      %485 = vrot.lane.b32.xlu0 %v396, 95
      %v486 = vpop.permute.xlu0 %485
      %vm487 = vcmask 777216
      %v488 = vsel %vm487, %v482, %v484
      %v489 = vsel %vm487, %v484, %v486
      %495 = vrot.lane.b32.xlu0 %v389, 94
      %v496 = vpop.permute.xlu0 %495
      %497 = vrot.lane.b32.xlu0 %v390, 94
      %v498 = vpop.permute.xlu0 %497
      %499 = vrot.lane.b32.xlu0 %v391, 94
      %v500 = vpop.permute.xlu0 %499
      %vm501 = vcmask 769024
      %v502 = vsel %vm501, %v496, %v498
      %v503 = vsel %vm501, %v498, %v500
      %vm504 = vcmask 1043456
      %v505 = vsel %vm504, %v320, %v404
      %v506 = vsel %vm504, %v321, %v405
      %v507 = vsel %vm504, %v418, %v435
      %v508 = vsel %vm504, %v419, %v436
      %v509 = vsel %vm504, %v446, %v463
      %v510 = vsel %vm504, %v447, %v464
      %v511 = vsel %vm504, %v477, %v488
      %v512 = vsel %vm504, %v478, %v489
      %v513 = vld [vmem:[%s266] sm:$0xff]
      %515 = vst [vmem:[#allocation1] ss:$2 sm:$0xff] %v513
      %v516 = vld.sshfl [vmem:[#allocation1] sm:$0xff pattern:$0x75316420]
      %v517 = vld.sshfl [vmem:[#allocation1 + $0x8] sm:$0xff pattern:$0x75316420]
      %vm520 = vcmask 293888
      %v522 = vsel %vm520, %v296, 0
      %v524 = vsel %vm504, %v502, 0
      %v526 = vsel %vm504, %v503, 0
      %528 = vmatpush.msra.mxu0 0.0
      %529 = vmatpush.msra.mxu0 0.0
      %530 = vmatpush.msra.mxu0 0.0
      %531 = vmatpush.msra.mxu0 0.0
      %532 = vmatpush.msra.mxu0 0.0
      %533 = vmatpush.msra.mxu0 0.0
      %534 = vmatpush.msra.mxu0 0.0
      %535 = vmatpush.msra.mxu0 0.0
      %536 = vmatpush.msra.mxu0 0.0
      %537 = vmatpush.msra.mxu0 0.0
      %538 = vmatpush.msra.mxu0 0.0
      %539 = vmatpush.msra.mxu0 %v524
      %540 = vmatpush.msra.mxu0 %v511
      %541 = vmatpush.msra.mxu0 %v509
      %542 = vmatpush.msra.mxu0 %v507
      %543 = vmatpush.msra.mxu0 %v505
      %544 = vmatmul.f32.gmra.mxu0 %v522
      %v545 = vpop.f32.mrf.mxu0
      %v546 = vadd.f32 %v516, %v545
      %547 = vdwg.mxu0
      %548 = vmatpush.msra.mxu0 0.0
      %549 = vmatpush.msra.mxu0 0.0
      %550 = vmatpush.msra.mxu0 0.0
      %551 = vmatpush.msra.mxu0 0.0
      %552 = vmatpush.msra.mxu0 0.0
      %553 = vmatpush.msra.mxu0 0.0
      %554 = vmatpush.msra.mxu0 0.0
      %555 = vmatpush.msra.mxu0 0.0
      %556 = vmatpush.msra.mxu0 0.0
      %557 = vmatpush.msra.mxu0 0.0
      %558 = vmatpush.msra.mxu0 0.0
      %559 = vmatpush.msra.mxu0 %v526
      %560 = vmatpush.msra.mxu0 %v512
      %561 = vmatpush.msra.mxu0 %v510
      %562 = vmatpush.msra.mxu0 %v508
      %563 = vmatpush.msra.mxu0 %v506
      %564 = vmatmul.f32.gmra.mxu0 %v522
      %v565 = vpop.f32.mrf.mxu0
      %v566 = vadd.f32 %v517, %v565
      %567 = vdwg.mxu0
      %v570 = vrot.slane %v566, 4
      %v571 = vsel %vm504, %v546, %v570
      %573 = vst [vmem:[%s271] sm:$0xff] %v571
      %p574 = scmp.lt.s32.totalorder %s17, 1
      %s575 = scalar_select %p574, %s17, 1
      %s576 = smul.addr %s575, 2
      %s577 = smul.addr %s576, 4
      %s578 = scalar_lea.vmem %s6, %s577
      // Predicated region
      $region45: #{preact_block_forward.3} parent=43 // pred_check
        %p579 = pneg %p171
      $region46: #{preact_block_forward.3} parent=43 // pred_check_branch
        %581 = sbr.rel (%p579) target = $region48
      $region47: #{preact_block_forward.3} parent=43 // pred_region
        _
      $region48: #{preact_block_forward.3} parent=43 // pred_fallthru
        _
    $region44: #{preact_block_forward.3} parent=5 // pred_fallthru
      _
    %p582 = scmp.le.s32.totalorder 2, %s12
    // Predicated region
    $region49: #{preact_block_forward.3} parent=5 // pred_check
      %p583 = pneg %p582
    $region50: #{preact_block_forward.3} parent=5 // pred_check_branch
      %585 = sbr.rel (%p583) target = $region52
    $region51: #{preact_block_forward.3} parent=5 // pred_region
      %s586 = ssub.s32 %s12, 2
      // Predicated region
      $region53: #{preact_block_forward.3} parent=51 // pred_check
        %p587 = pneg %p177
      $region54: #{preact_block_forward.3} parent=51 // pred_check_branch
        %589 = sbr.rel (%p587) target = $region56
      $region55: #{preact_block_forward.3} parent=51 // pred_region
        %p590 = scmp.lt.s32.totalorder %s18, 1
        %s591 = scalar_select %p590, %s18, 1
        %s592 = smul.addr %s591, 2
        %s593 = smul.addr %s592, 4
        %s594 = scalar_lea.vmem %s6, %s593
      $region56: #{preact_block_forward.3} parent=51 // pred_fallthru
        _
    $region52: #{preact_block_forward.3} parent=5 // pred_fallthru
      _
  $region6: #{preact_block_forward.3} parent=0 // loop_footer
    %s16 = sadd.s32 1, %s12
  $region7: #{preact_block_forward.3} parent=0 // loop_footer_branch
    %11 = sbr.rel target = $region3
  $region8: #{preact_block_forward.3} parent=0 // loop_exit
    _

</llo_original>
